<compile_context>
chip_gen: v7x
topology: tpu7x:2x2x1
jax: 0.10.0
libtpu: 0.0.40
codegen_flags: <defaults>
</compile_context>

<pallas_src>
from functools import partial

import jax
import jax.numpy as jnp
from jax.experimental import pallas as pl
from jax.experimental.pallas import tpu as pltpu

NEG_SLOPE = 0.01  # nn.LeakyReLU default


def _leaky(x):
    return jnp.where(x >= 0, x, NEG_SLOPE * x)


def cge_kernel(ne_x_ref, conn_ref, w_emb_ref, w_qkv_ref, ffn_w_ref, w_gf_ref,
               bias_ref, out_ref, *, G, N):
    f32 = jnp.float32
    GN = G * N
    HID = out_ref.shape[1]
    GE = ne_x_ref.shape[0] - GN
    INP = w_emb_ref.shape[1]

    def mm(a, b):
        return jnp.dot(a, b, preferred_element_type=f32)

    # Packed biases: row 0 = b_emb, row 1 = ffn_b, row 2 = [la_gate_b | la_feat_b].
    b_emb = bias_ref[0:1, :INP]
    ffn_b = bias_ref[1:2, :HID]
    gf_b = bias_ref[2:3, :]

    # --- emb_layer: ONE fused (G*(N+E), F) @ (F, INP) matmul for all G graphs ---
    emb = mm(ne_x_ref[...], w_emb_ref[...]) + b_emb                # (GN+GE, INP)
    nodes = emb[:GN, :]                                            # stacked node rows
    edges = emb[GN:, :]                                            # stacked edge rows

    # --- g.update_all(fn.u_mul_e, fn.sum): one-hots built in-kernel ---
    # conn row 0 = stacked src node id per edge, row 1 = stacked dst node id.
    # Graph offsets are baked into the indices, so these matrices are
    # block-diagonal by construction (no cross-graph mixing).
    node_iota = jax.lax.broadcasted_iota(jnp.int32, (GN, GE), 0)
    src_m = (node_iota == conn_ref[0:1, :]).astype(f32)            # (GN, GE)
    dst_m = (node_iota == conn_ref[1:2, :]).astype(f32)            # (GN, GE)
    gathered = jax.lax.dot_general(src_m, nodes, (((0,), (0,)), ((), ())),
                                   preferred_element_type=f32)     # (GE, INP) = h[src[e]]
    agg = mm(dst_m, gathered * edges)                              # (GN, INP)
    h = _leaky(agg + nodes)                                        # + nodes, LeakyReLU

    # --- per-graph block mask: same[i, j] = 1 iff rows i, j are in the same
    #     graph.  Built from a (GN, G) membership matrix with 2-D iota only
    #     (no leading-axis iota, no integer division) + one tiny MXU push.
    #     Reused below for the LocalAggr segmented softmax denominator. ---
    ri = jax.lax.broadcasted_iota(jnp.int32, (GN, G), 0)
    ci = jax.lax.broadcasted_iota(jnp.int32, (GN, G), 1)
    memb = ((ri >= ci * N) & (ri < (ci + 1) * N)).astype(f32)      # (GN, G)
    same = jax.lax.dot_general(memb, memb, (((1,), (1,)), ((), ())),
                               preferred_element_type=f32)         # (GN, GN) in {0, 1}

    # --- GlobalAggr: fused QKV matmul, masked lane-axis softmax ---
    qkv = mm(h, w_qkv_ref[...])                                    # (GN, 3*HID)
    q = qkv[:, :HID]
    k = qkv[:, HID:2 * HID]
    v = qkv[:, 2 * HID:]
    # s[i, j] = q_i . k_j = attn[j, i]; per-graph softmax over the lane axis.
    s = jax.lax.dot_general(q, k, (((1,), (1,)), ((), ())),
                            preferred_element_type=f32)            # (GN, GN)
    s = jnp.where(same > 0.5, s, -1e30)
    s = s - jnp.max(s, axis=-1, keepdims=True)
    es = jnp.exp(s)
    p = es * pl.reciprocal(jnp.sum(es, axis=-1, keepdims=True), approx=True)
    # (attn @ v)[a, :] = sum_b p[b, a] v[b, :] -> contract p axis 0 with v axis 0.
    h = jax.lax.dot_general(p, v, (((0,), (0,)), ((), ())),
                            preferred_element_type=f32)            # (GN, HID)

    # --- ffn: Linear(HID, HID) + LeakyReLU ---
    h = _leaky(mm(h, ffn_w_ref[...]) + ffn_b)

    # --- LocalAggr: fused [gate | feat] matmul, per-graph softmax over nodes ---
    gf = mm(h, w_gf_ref[...]) + gf_b                               # (GN, 2*HID)
    gate = gf[:, :HID]
    feat = gf[:, HID:]
    # Subtracting the global column max is a valid stabilizer (softmax is shift
    # invariant); per-graph denominators come from one matmul with `same`.
    gate = gate - jnp.max(gate, axis=0, keepdims=True)
    eg = jnp.exp(gate)
    denom = mm(same, eg)                                           # (GN, HID)
    gate = eg * pl.reciprocal(denom, approx=True)

    # --- final activation; compact (GN, HID) store (no zero-pad lanes) ---
    out_ref[...] = _leaky(feat * gate)


def cge_forward(node_x, edge_x, src_idx, dst_idx, params, *, graphs_per_step=None):
    """node_x (B,N,F), edge_x (B,E,F), src_idx/dst_idx (B,E) int node ids."""
    B, N, F = node_x.shape
    E = edge_x.shape[1]
    INP = params["w_emb"].shape[1]
    HID = params["ffn_w"].shape[1]
    f32 = jnp.float32

    assert N % 8 == 0 and E % 8 == 0, "pad node/edge rows to a multiple of 8"
    assert INP <= 2 * HID

    if graphs_per_step is None:
        # >= 2 grid steps keeps both v7x TensorCores busy via "parallel";
        # on v5e/v6e the extra step only costs ~0.35us.
        graphs_per_step = B // 2 if (B % 2 == 0 and B >= 2) else B
    G = graphs_per_step
    assert B % G == 0
    S = B // G
    GN, GE = G * N, G * E

    # One per-step feature slab: the G graphs' node rows, then their edge rows.
    ne_x = jnp.concatenate(
        [node_x.astype(f32).reshape(S, GN, F),
         edge_x.astype(f32).reshape(S, GE, F)], axis=1)            # (S, GN+GE, F)

    # Connectivity as one tiny int32 array per step (stacked-node indices with
    # per-graph offsets baked in); the one-hots are built in-kernel.
    offs = (jnp.arange(B, dtype=jnp.int32) % G)[:, None] * N       # (B, 1)
    gsrc = (src_idx.astype(jnp.int32) + offs).reshape(S, GE)
    gdst = (dst_idx.astype(jnp.int32) + offs).reshape(S, GE)
    conn = jnp.stack([gsrc, gdst], axis=1)                         # (S, 2, GE)

    # Fused weights: QKV -> (INP, 3*HID), gate|feat -> (HID, 2*HID).
    w_qkv = jnp.concatenate(
        [params["wq_g"], params["wk_g"], params["wg_g"]], axis=1)
    w_gf = jnp.concatenate(
        [params["la_gate_w"], params["la_feat_w"]], axis=1)

    # All biases packed into one (8, 2*HID) array -> a single DMA.
    biases = jnp.zeros((8, 2 * HID), f32)
    biases = biases.at[0, :INP].set(params["b_emb"].reshape(-1))
    biases = biases.at[1, :HID].set(params["ffn_b"].reshape(-1))
    biases = biases.at[2, :HID].set(params["la_gate_b"].reshape(-1))
    biases = biases.at[2, HID:].set(params["la_feat_b"].reshape(-1))

    step_map = lambda s: (s, 0, 0)      # per-step graph blocks
    const_map = lambda s: (0, 0)        # weights/biases stay VMEM-resident

    out = pl.pallas_call(
        partial(cge_kernel, G=G, N=N),
        out_shape=jax.ShapeDtypeStruct((B * N, HID), f32),
        grid=(S,),
        in_specs=[
            pl.BlockSpec((None, GN + GE, F), step_map),   # fused node+edge feats
            pl.BlockSpec((None, 2, GE), step_map),        # src/dst indices (int32)
            pl.BlockSpec((F, INP), const_map),            # w_emb
            pl.BlockSpec((INP, 3 * HID), const_map),      # [wq | wk | wg]
            pl.BlockSpec((HID, HID), const_map),          # ffn_w
            pl.BlockSpec((HID, 2 * HID), const_map),      # [la_gate_w | la_feat_w]
            pl.BlockSpec((8, 2 * HID), const_map),        # packed biases
        ],
        out_specs=pl.BlockSpec((GN, HID), lambda s: (s, 0)),
        compiler_params=pltpu.CompilerParams(
            dimension_semantics=("parallel",)),
    )(ne_x, conn, params["w_emb"], w_qkv, params["ffn_w"], w_gf, biases)

    return out.reshape(B, N, HID)


def _xavier_uniform(key, fan_in, fan_out, gain=1.0):
    bound = gain * jnp.sqrt(6.0 / (fan_in + fan_out))
    return jax.random.uniform(key, (fan_in, fan_out), jnp.float32, -bound, bound)


def _reference(node_x, edge_x, src_idx, dst_idx, p):
    """Pure-JAX reference mirroring the PyTorch forward (layer_num=1), f32 only."""
    hi = jax.lax.Precision.HIGHEST
    N = node_x.shape[1]

    def mm(a, b):
        return jnp.dot(a, b, preferred_element_type=jnp.float32, precision=hi)

    def one_graph(nx, ex, s_idx, d_idx):
        nodes = mm(nx, p["w_emb"]) + p["b_emb"]
        edges = mm(ex, p["w_emb"]) + p["b_emb"]
        so = jax.nn.one_hot(s_idx, N, dtype=jnp.float32)            # (E, N)
        do = jax.nn.one_hot(d_idx, N, dtype=jnp.float32).T          # (N, E)
        gathered = mm(so, nodes)                                    # h[src[e]]
        agg = mm(do, gathered * edges)                              # sum over in-edges
        h = _leaky(agg + nodes)
        q, k = mm(h, p["wq_g"]), mm(h, p["wk_g"])
        attn = jax.nn.softmax(mm(k, q.T), axis=0)
        h = mm(attn, mm(h, p["wg_g"]))
        h = _leaky(mm(h, p["ffn_w"]) + p["ffn_b"])
        gate = jax.nn.softmax(mm(h, p["la_gate_w"]) + p["la_gate_b"], axis=0)
        feat = mm(h, p["la_feat_w"]) + p["la_feat_b"]
        return _leaky(feat * gate)

    return jax.vmap(one_graph)(node_x, edge_x, src_idx, dst_idx)


if __name__ == "__main__":
    # 8 graphs, each: 8 nodes, 16 edges, raw feat 8, inp 16, hid 32.
    B, N, E, F, INP, HID = 8, 8, 16, 8, 16, 32
    relu_gain = jnp.sqrt(2.0)  # nn.init.calculate_gain('relu')

    key = jax.random.PRNGKey(0)
    ks = jax.random.split(key, 14)

    node_x = jax.random.normal(ks[0], (B, N, F), jnp.float32)
    edge_x = jax.random.normal(ks[1], (B, E, F), jnp.float32)

    # Deterministic per-graph edge lists as index arrays.
    src = jax.random.randint(ks[2], (B, E), 0, N)
    dst = jax.random.randint(ks[3], (B, E), 0, N)

    params = {
        # emb_layer: Linear(F, INP)
        "w_emb": _xavier_uniform(ks[4], F, INP),
        "b_emb": jnp.zeros((1, INP), jnp.float32),
        # GlobalAggr(INP, HID): xavier_uniform with relu gain
        "wq_g": _xavier_uniform(ks[5], INP, HID, relu_gain),
        "wk_g": _xavier_uniform(ks[6], INP, HID, relu_gain),
        "wg_g": _xavier_uniform(ks[7], INP, HID, relu_gain),
        # ffn: Linear(HID, HID)
        "ffn_w": _xavier_uniform(ks[8], HID, HID),
        "ffn_b": 0.01 * jax.random.normal(ks[9], (1, HID), jnp.float32),
        # LocalAggr(HID, HID): gate_nn = wq (Linear), feat_nn = wk (Linear)
        "la_gate_w": _xavier_uniform(ks[10], HID, HID),
        "la_gate_b": 0.01 * jax.random.normal(ks[11], (1, HID), jnp.float32),
        "la_feat_w": _xavier_uniform(ks[12], HID, HID),
        "la_feat_b": 0.01 * jax.random.normal(ks[13], (1, HID), jnp.float32),
    }

    out = jax.block_until_ready(cge_forward(node_x, edge_x, src, dst, params))
    ref = jax.block_until_ready(_reference(node_x, edge_x, src, dst, params))

    assert out.shape == (B, N, HID)
    # All-f32 kernel; tolerance covers approx reciprocal + accumulation order.
    assert jnp.allclose(out, ref, rtol=1e-2, atol=1e-2), "mismatch vs JAX reference"

    print("KERNEL_OK")
</pallas_src>

<mosaic_0001>
module attributes {stable_mosaic.version = 11 : i64} {
  func.func @cge_kernel(%arg0: i32, %arg1: memref<1x96x8xf32, #tpu.memory_space<vmem>>, %arg2: memref<1x2x64xi32, #tpu.memory_space<vmem>>, %arg3: memref<8x16xf32, #tpu.memory_space<vmem>>, %arg4: memref<16x96xf32, #tpu.memory_space<vmem>>, %arg5: memref<32x32xf32, #tpu.memory_space<vmem>>, %arg6: memref<32x64xf32, #tpu.memory_space<vmem>>, %arg7: memref<8x64xf32, #tpu.memory_space<vmem>>, %arg8: memref<32x32xf32, #tpu.memory_space<vmem>>) attributes {dimension_semantics = [#tpu.dimension_semantics<parallel>], iteration_bounds = array<i64: 2>, scalar_prefetch = 0 : i64, scratch_operands = 0 : i64, tpu.core_type = #tpu.core_type<tc>, window_params = [{transform_indices = @transform_0, window_bounds = array<i64: 1, 96, 8>}, {transform_indices = @transform_1, window_bounds = array<i64: 1, 2, 64>}, {pipeline_mode = #tpu.pipeline_mode<synchronous>, transform_indices = @transform_2, window_bounds = array<i64: 8, 16>}, {pipeline_mode = #tpu.pipeline_mode<synchronous>, transform_indices = @transform_3, window_bounds = array<i64: 16, 96>}, {pipeline_mode = #tpu.pipeline_mode<synchronous>, transform_indices = @transform_4, window_bounds = array<i64: 32, 32>}, {pipeline_mode = #tpu.pipeline_mode<synchronous>, transform_indices = @transform_5, window_bounds = array<i64: 32, 64>}, {pipeline_mode = #tpu.pipeline_mode<synchronous>, transform_indices = @transform_6, window_bounds = array<i64: 8, 64>}, {transform_indices = @transform_7, window_bounds = array<i64: 32, 32>}]} {
    %c0 = arith.constant 0 : index
    %c0_0 = arith.constant 0 : index
    %0 = vector.load %arg7[%c0, %c0_0] : memref<8x64xf32, #tpu.memory_space<vmem>>, vector<1x16xf32>
    %c1 = arith.constant 1 : index
    %c0_1 = arith.constant 0 : index
    %1 = vector.load %arg7[%c1, %c0_1] : memref<8x64xf32, #tpu.memory_space<vmem>>, vector<1x32xf32>
    %c2 = arith.constant 2 : index
    %c0_2 = arith.constant 0 : index
    %2 = vector.load %arg7[%c2, %c0_2] : memref<8x64xf32, #tpu.memory_space<vmem>>, vector<1x64xf32>
    %c0_3 = arith.constant 0 : index
    %c0_4 = arith.constant 0 : index
    %c0_5 = arith.constant 0 : index
    %3 = vector.load %arg1[%c0_3, %c0_4, %c0_5] : memref<1x96x8xf32, #tpu.memory_space<vmem>>, vector<1x96x8xf32>
    %4 = vector.shape_cast %3 : vector<1x96x8xf32> to vector<96x8xf32>
    %c0_6 = arith.constant 0 : index
    %c0_7 = arith.constant 0 : index
    %5 = vector.load %arg3[%c0_6, %c0_7] : memref<8x16xf32, #tpu.memory_space<vmem>>, vector<8x16xf32>
    %cst = arith.constant dense<0.000000e+00> : vector<96x16xf32>
    %6 = tpu.matmul %4, %5, %cst {dimension_numbers = #tpu.dot_dimension_numbers<[1], [0], [0], [1], [0, 0, 1, 1], [], []>} : vector<96x8xf32>, vector<8x16xf32>, vector<96x16xf32> -> vector<96x16xf32>
    %7 = vector.broadcast %0 : vector<1x16xf32> to vector<96x16xf32>
    %8 = arith.addf %6, %7 : vector<96x16xf32>
    %9 = vector.extract_strided_slice %8 {offsets = [0, 0], sizes = [32, 16], strides = [1, 1]} : vector<96x16xf32> to vector<32x16xf32>
    %10 = vector.extract_strided_slice %8 {offsets = [32, 0], sizes = [64, 16], strides = [1, 1]} : vector<96x16xf32> to vector<64x16xf32>
    %11 = tpu.iota {dimensions = array<i32: 0>} : vector<32x64xi32>
    %c0_8 = arith.constant 0 : index
    %c0_9 = arith.constant 0 : index
    %c0_10 = arith.constant 0 : index
    %12 = vector.load %arg2[%c0_8, %c0_9, %c0_10] : memref<1x2x64xi32, #tpu.memory_space<vmem>>, vector<1x1x64xi32>
    %13 = vector.shape_cast %12 : vector<1x1x64xi32> to vector<1x64xi32>
    %14 = vector.broadcast %13 : vector<1x64xi32> to vector<32x64xi32>
    %15 = arith.cmpi eq, %11, %14 : vector<32x64xi32>
    %16 = arith.extui %15 : vector<32x64xi1> to vector<32x64xi32>
    %17 = arith.sitofp %16 : vector<32x64xi32> to vector<32x64xf32>
    %c0_11 = arith.constant 0 : index
    %c1_12 = arith.constant 1 : index
    %c0_13 = arith.constant 0 : index
    %18 = vector.load %arg2[%c0_11, %c1_12, %c0_13] : memref<1x2x64xi32, #tpu.memory_space<vmem>>, vector<1x1x64xi32>
    %19 = vector.shape_cast %18 : vector<1x1x64xi32> to vector<1x64xi32>
    %20 = vector.broadcast %19 : vector<1x64xi32> to vector<32x64xi32>
    %21 = arith.cmpi eq, %11, %20 : vector<32x64xi32>
    %22 = arith.extui %21 : vector<32x64xi1> to vector<32x64xi32>
    %23 = arith.sitofp %22 : vector<32x64xi32> to vector<32x64xf32>
    %cst_14 = arith.constant dense<0.000000e+00> : vector<64x16xf32>
    %24 = tpu.matmul %17, %9, %cst_14 {dimension_numbers = #tpu.dot_dimension_numbers<[0], [0], [1], [1], [0, 1, 1, 1], [], []>} : vector<32x64xf32>, vector<32x16xf32>, vector<64x16xf32> -> vector<64x16xf32>
    %25 = arith.mulf %24, %10 : vector<64x16xf32>
    %cst_15 = arith.constant dense<0.000000e+00> : vector<32x16xf32>
    %26 = tpu.matmul %23, %25, %cst_15 {dimension_numbers = #tpu.dot_dimension_numbers<[1], [0], [0], [1], [0, 0, 1, 1], [], []>} : vector<32x64xf32>, vector<64x16xf32>, vector<32x16xf32> -> vector<32x16xf32>
    %27 = arith.addf %26, %9 : vector<32x16xf32>
    %cst_16 = arith.constant 0.000000e+00 : f32
    %28 = vector.broadcast %cst_16 : f32 to vector<32x16xf32>
    %29 = arith.cmpf oge, %27, %28 : vector<32x16xf32>
    %cst_17 = arith.constant 0.00999999977 : f32
    %30 = vector.broadcast %cst_17 : f32 to vector<32x16xf32>
    %31 = arith.mulf %30, %27 : vector<32x16xf32>
    %32 = arith.select %29, %27, %31 : vector<32x16xi1>, vector<32x16xf32>
    %33 = tpu.iota {dimensions = array<i32: 0>} : vector<32x4xi32>
    %34 = tpu.iota {dimensions = array<i32: 1>} : vector<32x4xi32>
    %c8_i32 = arith.constant 8 : i32
    %35 = vector.broadcast %c8_i32 : i32 to vector<32x4xi32>
    %36 = arith.muli %34, %35 : vector<32x4xi32>
    %37 = arith.cmpi sge, %33, %36 : vector<32x4xi32>
    %c1_i32 = arith.constant 1 : i32
    %38 = vector.broadcast %c1_i32 : i32 to vector<32x4xi32>
    %39 = arith.addi %34, %38 : vector<32x4xi32>
    %c8_i32_18 = arith.constant 8 : i32
    %40 = vector.broadcast %c8_i32_18 : i32 to vector<32x4xi32>
    %41 = arith.muli %39, %40 : vector<32x4xi32>
    %42 = arith.cmpi slt, %33, %41 : vector<32x4xi32>
    %43 = arith.andi %37, %42 : vector<32x4xi1>
    %44 = arith.extui %43 : vector<32x4xi1> to vector<32x4xi32>
    %45 = arith.sitofp %44 : vector<32x4xi32> to vector<32x4xf32>
    %cst_19 = arith.constant dense<0.000000e+00> : vector<32x32xf32>
    %46 = tpu.matmul %45, %45, %cst_19 {dimension_numbers = #tpu.dot_dimension_numbers<[1], [1], [0], [0], [0, 0, 1, 0], [], []>} : vector<32x4xf32>, vector<32x4xf32>, vector<32x32xf32> -> vector<32x32xf32>
    %c0_20 = arith.constant 0 : index
    %c0_21 = arith.constant 0 : index
    %47 = vector.load %arg4[%c0_20, %c0_21] : memref<16x96xf32, #tpu.memory_space<vmem>>, vector<16x96xf32>
    %cst_22 = arith.constant dense<0.000000e+00> : vector<32x96xf32>
    %48 = tpu.matmul %32, %47, %cst_22 {dimension_numbers = #tpu.dot_dimension_numbers<[1], [0], [0], [1], [0, 0, 1, 1], [], []>} : vector<32x16xf32>, vector<16x96xf32>, vector<32x96xf32> -> vector<32x96xf32>
    %49 = vector.extract_strided_slice %48 {offsets = [0, 0], sizes = [32, 32], strides = [1, 1]} : vector<32x96xf32> to vector<32x32xf32>
    %50 = vector.extract_strided_slice %48 {offsets = [0, 32], sizes = [32, 32], strides = [1, 1]} : vector<32x96xf32> to vector<32x32xf32>
    %51 = vector.extract_strided_slice %48 {offsets = [0, 64], sizes = [32, 32], strides = [1, 1]} : vector<32x96xf32> to vector<32x32xf32>
    %cst_23 = arith.constant dense<0.000000e+00> : vector<32x32xf32>
    %52 = tpu.matmul %49, %50, %cst_23 {dimension_numbers = #tpu.dot_dimension_numbers<[1], [1], [0], [0], [0, 0, 1, 0], [], []>} : vector<32x32xf32>, vector<32x32xf32>, vector<32x32xf32> -> vector<32x32xf32>
    %cst_24 = arith.constant 5.000000e-01 : f32
    %53 = vector.broadcast %cst_24 : f32 to vector<32x32xf32>
    %54 = arith.cmpf ogt, %46, %53 : vector<32x32xf32>
    %cst_25 = arith.constant -1.000000e+30 : f32
    %55 = vector.broadcast %cst_25 : f32 to vector<32x32xf32>
    %56 = arith.select %54, %52, %55 : vector<32x32xi1>, vector<32x32xf32>
    %cst_26 = arith.constant dense<0xFF800000> : vector<32xf32>
    %57 = vector.multi_reduction <maximumf>, %56, %cst_26 [1] : vector<32x32xf32> to vector<32xf32>
    %58 = vector.shape_cast %57 : vector<32xf32> to vector<32x1xf32>
    %59 = vector.broadcast %58 : vector<32x1xf32> to vector<32x32xf32>
    %60 = arith.subf %56, %59 : vector<32x32xf32>
    %61 = math.exp %60 : vector<32x32xf32>
    %cst_27 = arith.constant dense<0.000000e+00> : vector<32xf32>
    %62 = vector.multi_reduction <add>, %61, %cst_27 [1] : vector<32x32xf32> to vector<32xf32>
    %63 = vector.shape_cast %62 : vector<32xf32> to vector<32x1xf32>
    %64 = tpu.reciprocal %63 {approx = true} : vector<32x1xf32> -> vector<32x1xf32>
    %65 = vector.broadcast %64 : vector<32x1xf32> to vector<32x32xf32>
    %66 = arith.mulf %61, %65 : vector<32x32xf32>
    %cst_28 = arith.constant dense<0.000000e+00> : vector<32x32xf32>
    %67 = tpu.matmul %66, %51, %cst_28 {dimension_numbers = #tpu.dot_dimension_numbers<[0], [0], [1], [1], [0, 1, 1, 1], [], []>} : vector<32x32xf32>, vector<32x32xf32>, vector<32x32xf32> -> vector<32x32xf32>
    %c0_29 = arith.constant 0 : index
    %c0_30 = arith.constant 0 : index
    %68 = vector.load %arg5[%c0_29, %c0_30] : memref<32x32xf32, #tpu.memory_space<vmem>>, vector<32x32xf32>
    %cst_31 = arith.constant dense<0.000000e+00> : vector<32x32xf32>
    %69 = tpu.matmul %67, %68, %cst_31 {dimension_numbers = #tpu.dot_dimension_numbers<[1], [0], [0], [1], [0, 0, 1, 1], [], []>} : vector<32x32xf32>, vector<32x32xf32>, vector<32x32xf32> -> vector<32x32xf32>
    %70 = vector.broadcast %1 : vector<1x32xf32> to vector<32x32xf32>
    %71 = arith.addf %69, %70 : vector<32x32xf32>
    %cst_32 = arith.constant 0.000000e+00 : f32
    %72 = vector.broadcast %cst_32 : f32 to vector<32x32xf32>
    %73 = arith.cmpf oge, %71, %72 : vector<32x32xf32>
    %cst_33 = arith.constant 0.00999999977 : f32
    %74 = vector.broadcast %cst_33 : f32 to vector<32x32xf32>
    %75 = arith.mulf %74, %71 : vector<32x32xf32>
    %76 = arith.select %73, %71, %75 : vector<32x32xi1>, vector<32x32xf32>
    %c0_34 = arith.constant 0 : index
    %c0_35 = arith.constant 0 : index
    %77 = vector.load %arg6[%c0_34, %c0_35] : memref<32x64xf32, #tpu.memory_space<vmem>>, vector<32x64xf32>
    %cst_36 = arith.constant dense<0.000000e+00> : vector<32x64xf32>
    %78 = tpu.matmul %76, %77, %cst_36 {dimension_numbers = #tpu.dot_dimension_numbers<[1], [0], [0], [1], [0, 0, 1, 1], [], []>} : vector<32x32xf32>, vector<32x64xf32>, vector<32x64xf32> -> vector<32x64xf32>
    %79 = vector.broadcast %2 : vector<1x64xf32> to vector<32x64xf32>
    %80 = arith.addf %78, %79 : vector<32x64xf32>
    %81 = vector.extract_strided_slice %80 {offsets = [0, 0], sizes = [32, 32], strides = [1, 1]} : vector<32x64xf32> to vector<32x32xf32>
    %82 = vector.extract_strided_slice %80 {offsets = [0, 32], sizes = [32, 32], strides = [1, 1]} : vector<32x64xf32> to vector<32x32xf32>
    %cst_37 = arith.constant dense<0xFF800000> : vector<32xf32>
    %83 = vector.multi_reduction <maximumf>, %81, %cst_37 [0] : vector<32x32xf32> to vector<32xf32>
    %84 = vector.shape_cast %83 : vector<32xf32> to vector<1x32xf32>
    %85 = vector.broadcast %84 : vector<1x32xf32> to vector<32x32xf32>
    %86 = arith.subf %81, %85 : vector<32x32xf32>
    %87 = math.exp %86 : vector<32x32xf32>
    %cst_38 = arith.constant dense<0.000000e+00> : vector<32x32xf32>
    %88 = tpu.matmul %46, %87, %cst_38 {dimension_numbers = #tpu.dot_dimension_numbers<[1], [0], [0], [1], [0, 0, 1, 1], [], []>} : vector<32x32xf32>, vector<32x32xf32>, vector<32x32xf32> -> vector<32x32xf32>
    %89 = tpu.reciprocal %88 {approx = true} : vector<32x32xf32> -> vector<32x32xf32>
    %90 = arith.mulf %87, %89 : vector<32x32xf32>
    %91 = arith.mulf %82, %90 : vector<32x32xf32>
    %cst_39 = arith.constant 0.000000e+00 : f32
    %92 = vector.broadcast %cst_39 : f32 to vector<32x32xf32>
    %93 = arith.cmpf oge, %91, %92 : vector<32x32xf32>
    %cst_40 = arith.constant 0.00999999977 : f32
    %94 = vector.broadcast %cst_40 : f32 to vector<32x32xf32>
    %95 = arith.mulf %94, %91 : vector<32x32xf32>
    %96 = arith.select %93, %91, %95 : vector<32x32xi1>, vector<32x32xf32>
    %c0_41 = arith.constant 0 : index
    %c0_42 = arith.constant 0 : index
    %97 = vector.load %arg8[%c0_41, %c0_42] : memref<32x32xf32, #tpu.memory_space<vmem>>, vector<32x32xf32>
    tpu.vector_store %arg8[%c0_41, %c0_42], %96 {strides = array<i32>} : memref<32x32xf32, #tpu.memory_space<vmem>>, vector<32x32xf32>,
    return
  }
  func.func @transform_0(%arg0: i32) -> (i32, i32, i32) {
    %c0_i32 = arith.constant 0 : i32
    %c0_i32_0 = arith.constant 0 : i32
    %c0_i32_1 = arith.constant 0 : i32
    return %arg0, %c0_i32, %c0_i32_0 : i32, i32, i32
  }
  func.func @transform_1(%arg0: i32) -> (i32, i32, i32) {
    %c0_i32 = arith.constant 0 : i32
    %c0_i32_0 = arith.constant 0 : i32
    %c0_i32_1 = arith.constant 0 : i32
    return %arg0, %c0_i32, %c0_i32_0 : i32, i32, i32
  }
  func.func @transform_2(%arg0: i32) -> (i32, i32) {
    %c0_i32 = arith.constant 0 : i32
    %c0_i32_0 = arith.constant 0 : i32
    %c0_i32_1 = arith.constant 0 : i32
    return %c0_i32, %c0_i32_0 : i32, i32
  }
  func.func @transform_3(%arg0: i32) -> (i32, i32) {
    %c0_i32 = arith.constant 0 : i32
    %c0_i32_0 = arith.constant 0 : i32
    %c0_i32_1 = arith.constant 0 : i32
    return %c0_i32, %c0_i32_0 : i32, i32
  }
  func.func @transform_4(%arg0: i32) -> (i32, i32) {
    %c0_i32 = arith.constant 0 : i32
    %c0_i32_0 = arith.constant 0 : i32
    %c0_i32_1 = arith.constant 0 : i32
    return %c0_i32, %c0_i32_0 : i32, i32
  }
  func.func @transform_5(%arg0: i32) -> (i32, i32) {
    %c0_i32 = arith.constant 0 : i32
    %c0_i32_0 = arith.constant 0 : i32
    %c0_i32_1 = arith.constant 0 : i32
    return %c0_i32, %c0_i32_0 : i32, i32
  }
  func.func @transform_6(%arg0: i32) -> (i32, i32) {
    %c0_i32 = arith.constant 0 : i32
    %c0_i32_0 = arith.constant 0 : i32
    %c0_i32_1 = arith.constant 0 : i32
    return %c0_i32, %c0_i32_0 : i32, i32
  }
  func.func @transform_7(%arg0: i32) -> (i32, i32) {
    %c0_i32 = arith.constant 0 : i32
    %c0_i32_0 = arith.constant 0 : i32
    return %arg0, %c0_i32 : i32, i32
  }
}

</mosaic_0001>

<llo_original>
// kernel: tpu_custom_call.1
$region0: #{tpu_custom_call.1}
  #allocation0 [shape = 'u32[]', space=smem, size = 0x4, offset = 0x4, fixed_abs, tag = 'smem constant byte address 0x4 - core index']
  #allocation1 [shape = 'u32[144,128]{1,0:T(1,128)}', space=vmem, size = 0x12000, scoped, tag = 'internal scratch']
  %s0 = inlined_call_operand.vmem [shape: f32[2,96,8], index: 0, kind: input, shape index: {}]
  %s1 = inlined_call_operand.vmem [shape: s32[2,2,64], index: 1, kind: input, shape index: {}]
  %s2 = inlined_call_operand.vmem [shape: f32[8,16], index: 2, kind: input, shape index: {}]
  %s3 = inlined_call_operand.vmem [shape: f32[16,96], index: 3, kind: input, shape index: {}]
  %s4 = inlined_call_operand.vmem [shape: f32[32,32], index: 4, kind: input, shape index: {}]
  %s5 = inlined_call_operand.vmem [shape: f32[32,64], index: 5, kind: input, shape index: {}]
  %s6 = inlined_call_operand.vmem [shape: f32[8,64], index: 6, kind: input, shape index: {}]
  %s7 = inlined_call_operand.vmem [shape: f32[64,32], index: 7, kind: output, shape index: {}]
  %s8 = sld [smem:[#allocation0]]
  $region61: #{tpu_custom_call.1} parent=0
    _
  %s10 = ssub.s32 1, %s8
  %s11 = scalar_select 0, %s10, %s8
  loop: start=0, step=1, limit=4
  $region2: #{tpu_custom_call.1} parent=0 // loop_pre_header
    _
  $region3: #{tpu_custom_call.1} parent=0 // loop_header
    %s13 = sphi 0, %s17
    %p14 = scmp.ge.s32.totalorder %s13, 4
    %s23 = sphi 0, %s25
    %s26 = sphi 0, %s23
    %s27 = sphi 0, %s26
    %s43 = sphi 0, %s27
    %s49 = sphi 0, %s51
    %s52 = sphi 0, %s49
    %s53 = sphi 0, %s52
    %s69 = sphi 0, %s53
    %s73 = sphi 0, %s73
    %s75 = sphi 0, %s73
    %s76 = sphi 0, %s75
    %s90 = sphi 0, %s76
    %s94 = sphi 0, %s94
    %s96 = sphi 0, %s94
    %s97 = sphi 0, %s96
    %s111 = sphi 0, %s97
    %s115 = sphi 0, %s115
    %s117 = sphi 0, %s115
    %s118 = sphi 0, %s117
    %s132 = sphi 0, %s118
    %s136 = sphi 0, %s136
    %s138 = sphi 0, %s136
    %s139 = sphi 0, %s138
    %s153 = sphi 0, %s139
    %s157 = sphi 0, %s157
    %s159 = sphi 0, %s157
    %s160 = sphi 0, %s159
    %s174 = sphi 0, %s160
    %s180 = sphi 0, %s182
    %s183 = sphi 0, %s180
    %s184 = sphi 0, %s183
    %s200 = sphi 0, %s184
  $region4: #{tpu_custom_call.1} parent=0 // loop_header_branch
    %16 = sbr.rel (%p14) target = $region8
  $region5: #{tpu_custom_call.1} parent=0 // loop_body
    %s18 = ssub.s32 %s13, 1
    %s19 = ssub.s32 %s13, 2
    %s20 = sadd.s32 %s13, 1
    %s21 = ssub.s32 %s13, %s20
    %p22 = scmp.eq.s32.totalorder %s21, 0
    %s24 = sadd.s32 %s23, 1
    %s25 = scalar_select %p22, %s23, %s24
    %p28 = pneg %p22
    %p29 = scmp.eq.s32.totalorder %s13, 1
    %p30 = por %p28, %p29
    %p31 = scmp.ne.s32.totalorder %s23, %s26
    %p32 = scmp.eq.s32.totalorder %s13, 0
    %p33 = por %p31, %p32
    %p34 = scmp.ne.s32.totalorder %s23, %s26
    %p35 = scmp.eq.s32.totalorder %s18, 1
    %p36 = por %p34, %p35
    %p37 = scmp.ne.s32.totalorder %s26, %s27
    %p38 = scmp.eq.s32.totalorder %s18, 0
    %p39 = por %p37, %p38
    %p40 = scmp.ne.s32.totalorder %s26, %s27
    %p41 = scmp.eq.s32.totalorder %s19, 1
    %p42 = por %p40, %p41
    %p44 = scmp.ne.s32.totalorder %s27, %s43
    %p45 = scmp.eq.s32.totalorder %s19, 0
    %p46 = por %p44, %p45
    %s47 = ssub.s32 %s13, %s20
    %p48 = scmp.eq.s32.totalorder %s47, 0
    %s50 = sadd.s32 %s49, 1
    %s51 = scalar_select %p48, %s49, %s50
    %p54 = pneg %p48
    %p55 = scmp.eq.s32.totalorder %s13, 1
    %p56 = por %p54, %p55
    %p57 = scmp.ne.s32.totalorder %s49, %s52
    %p58 = scmp.eq.s32.totalorder %s13, 0
    %p59 = por %p57, %p58
    %p60 = scmp.ne.s32.totalorder %s49, %s52
    %p61 = scmp.eq.s32.totalorder %s18, 1
    %p62 = por %p60, %p61
    %p63 = scmp.ne.s32.totalorder %s52, %s53
    %p64 = scmp.eq.s32.totalorder %s18, 0
    %p65 = por %p63, %p64
    %p66 = scmp.ne.s32.totalorder %s52, %s53
    %p67 = scmp.eq.s32.totalorder %s19, 1
    %p68 = por %p66, %p67
    %p70 = scmp.ne.s32.totalorder %s53, %s69
    %p71 = scmp.eq.s32.totalorder %s19, 0
    %p72 = por %p70, %p71
    %s74 = sadd.s32 %s73, 1
    %p77 = scmp.eq.s32.totalorder %s13, 1
    %p78 = scmp.ne.s32.totalorder %s73, %s75
    %p79 = scmp.eq.s32.totalorder %s13, 0
    %p80 = por %p78, %p79
    %p81 = scmp.ne.s32.totalorder %s73, %s75
    %p82 = scmp.eq.s32.totalorder %s18, 1
    %p83 = por %p81, %p82
    %p84 = scmp.ne.s32.totalorder %s75, %s76
    %p85 = scmp.eq.s32.totalorder %s18, 0
    %p86 = por %p84, %p85
    %p87 = scmp.ne.s32.totalorder %s75, %s76
    %p88 = scmp.eq.s32.totalorder %s19, 1
    %p89 = por %p87, %p88
    %p91 = scmp.ne.s32.totalorder %s76, %s90
    %p92 = scmp.eq.s32.totalorder %s19, 0
    %p93 = por %p91, %p92
    %s95 = sadd.s32 %s94, 1
    %p98 = scmp.eq.s32.totalorder %s13, 1
    %p99 = scmp.ne.s32.totalorder %s94, %s96
    %p100 = scmp.eq.s32.totalorder %s13, 0
    %p101 = por %p99, %p100
    %p102 = scmp.ne.s32.totalorder %s94, %s96
    %p103 = scmp.eq.s32.totalorder %s18, 1
    %p104 = por %p102, %p103
    %p105 = scmp.ne.s32.totalorder %s96, %s97
    %p106 = scmp.eq.s32.totalorder %s18, 0
    %p107 = por %p105, %p106
    %p108 = scmp.ne.s32.totalorder %s96, %s97
    %p109 = scmp.eq.s32.totalorder %s19, 1
    %p110 = por %p108, %p109
    %p112 = scmp.ne.s32.totalorder %s97, %s111
    %p113 = scmp.eq.s32.totalorder %s19, 0
    %p114 = por %p112, %p113
    %s116 = sadd.s32 %s115, 1
    %p119 = scmp.eq.s32.totalorder %s13, 1
    %p120 = scmp.ne.s32.totalorder %s115, %s117
    %p121 = scmp.eq.s32.totalorder %s13, 0
    %p122 = por %p120, %p121
    %p123 = scmp.ne.s32.totalorder %s115, %s117
    %p124 = scmp.eq.s32.totalorder %s18, 1
    %p125 = por %p123, %p124
    %p126 = scmp.ne.s32.totalorder %s117, %s118
    %p127 = scmp.eq.s32.totalorder %s18, 0
    %p128 = por %p126, %p127
    %p129 = scmp.ne.s32.totalorder %s117, %s118
    %p130 = scmp.eq.s32.totalorder %s19, 1
    %p131 = por %p129, %p130
    %p133 = scmp.ne.s32.totalorder %s118, %s132
    %p134 = scmp.eq.s32.totalorder %s19, 0
    %p135 = por %p133, %p134
    %s137 = sadd.s32 %s136, 1
    %p140 = scmp.eq.s32.totalorder %s13, 1
    %p141 = scmp.ne.s32.totalorder %s136, %s138
    %p142 = scmp.eq.s32.totalorder %s13, 0
    %p143 = por %p141, %p142
    %p144 = scmp.ne.s32.totalorder %s136, %s138
    %p145 = scmp.eq.s32.totalorder %s18, 1
    %p146 = por %p144, %p145
    %p147 = scmp.ne.s32.totalorder %s138, %s139
    %p148 = scmp.eq.s32.totalorder %s18, 0
    %p149 = por %p147, %p148
    %p150 = scmp.ne.s32.totalorder %s138, %s139
    %p151 = scmp.eq.s32.totalorder %s19, 1
    %p152 = por %p150, %p151
    %p154 = scmp.ne.s32.totalorder %s139, %s153
    %p155 = scmp.eq.s32.totalorder %s19, 0
    %p156 = por %p154, %p155
    %s158 = sadd.s32 %s157, 1
    %p161 = scmp.eq.s32.totalorder %s13, 1
    %p162 = scmp.ne.s32.totalorder %s157, %s159
    %p163 = scmp.eq.s32.totalorder %s13, 0
    %p164 = por %p162, %p163
    %p165 = scmp.ne.s32.totalorder %s157, %s159
    %p166 = scmp.eq.s32.totalorder %s18, 1
    %p167 = por %p165, %p166
    %p168 = scmp.ne.s32.totalorder %s159, %s160
    %p169 = scmp.eq.s32.totalorder %s18, 0
    %p170 = por %p168, %p169
    %p171 = scmp.ne.s32.totalorder %s159, %s160
    %p172 = scmp.eq.s32.totalorder %s19, 1
    %p173 = por %p171, %p172
    %p175 = scmp.ne.s32.totalorder %s160, %s174
    %p176 = scmp.eq.s32.totalorder %s19, 0
    %p177 = por %p175, %p176
    %s178 = ssub.s32 %s13, %s20
    %p179 = scmp.eq.s32.totalorder %s178, 0
    %s181 = sadd.s32 %s180, 1
    %s182 = scalar_select %p179, %s180, %s181
    %p185 = pneg %p179
    %p186 = scmp.eq.s32.totalorder %s13, 1
    %p187 = por %p185, %p186
    %p188 = scmp.ne.s32.totalorder %s180, %s183
    %p189 = scmp.eq.s32.totalorder %s13, 0
    %p190 = por %p188, %p189
    %p191 = scmp.ne.s32.totalorder %s180, %s183
    %p192 = scmp.eq.s32.totalorder %s18, 1
    %p193 = por %p191, %p192
    %p194 = scmp.ne.s32.totalorder %s183, %s184
    %p195 = scmp.eq.s32.totalorder %s18, 0
    %p196 = por %p194, %p195
    %p197 = scmp.ne.s32.totalorder %s183, %s184
    %p198 = scmp.eq.s32.totalorder %s19, 1
    %p199 = por %p197, %p198
    %p201 = scmp.ne.s32.totalorder %s184, %s200
    %p202 = scmp.eq.s32.totalorder %s19, 0
    %p203 = por %p201, %p202
    %p204 = scmp.le.s32.totalorder 1, %s13
    %p205 = scmp.lt.s32.totalorder %s13, 3
    %p206 = pnand %p204, %p205
    %p207 = pneg %p206
    // Predicated region
    $region9: #{tpu_custom_call.1} parent=5 // pred_check
      _
    $region10: #{tpu_custom_call.1} parent=5 // pred_check_branch
      %209 = sbr.rel (%p206) target = $region12
    $region11: #{tpu_custom_call.1} parent=5 // pred_region
      %s210 = ssub.s32 %s13, 1
      // Predicated region
      $region13: #{tpu_custom_call.1} parent=11 // pred_check
        %p211 = pneg %p86
      $region14: #{tpu_custom_call.1} parent=11 // pred_check_branch
        %213 = sbr.rel (%p211) target = $region16
      $region15: #{tpu_custom_call.1} parent=11 // pred_region
        _
      $region16: #{tpu_custom_call.1} parent=11 // pred_fallthru
        _
      // Predicated region
      $region17: #{tpu_custom_call.1} parent=11 // pred_check
        %p214 = pneg %p107
      $region18: #{tpu_custom_call.1} parent=11 // pred_check_branch
        %216 = sbr.rel (%p214) target = $region20
      $region19: #{tpu_custom_call.1} parent=11 // pred_region
        _
      $region20: #{tpu_custom_call.1} parent=11 // pred_fallthru
        _
      // Predicated region
      $region21: #{tpu_custom_call.1} parent=11 // pred_check
        %p217 = pneg %p128
      $region22: #{tpu_custom_call.1} parent=11 // pred_check_branch
        %219 = sbr.rel (%p217) target = $region24
      $region23: #{tpu_custom_call.1} parent=11 // pred_region
        _
      $region24: #{tpu_custom_call.1} parent=11 // pred_fallthru
        _
      // Predicated region
      $region25: #{tpu_custom_call.1} parent=11 // pred_check
        %p220 = pneg %p149
      $region26: #{tpu_custom_call.1} parent=11 // pred_check_branch
        %222 = sbr.rel (%p220) target = $region28
      $region27: #{tpu_custom_call.1} parent=11 // pred_region
        _
      $region28: #{tpu_custom_call.1} parent=11 // pred_fallthru
        _
      // Predicated region
      $region29: #{tpu_custom_call.1} parent=11 // pred_check
        %p223 = pneg %p170
      $region30: #{tpu_custom_call.1} parent=11 // pred_check_branch
        %225 = sbr.rel (%p223) target = $region32
      $region31: #{tpu_custom_call.1} parent=11 // pred_region
        _
      $region32: #{tpu_custom_call.1} parent=11 // pred_fallthru
        _
    $region12: #{tpu_custom_call.1} parent=5 // pred_fallthru
      _
    %p226 = scmp.lt.s32.totalorder %s13, 2
    // Predicated region
    $region33: #{tpu_custom_call.1} parent=5 // pred_check
      %p227 = pneg %p226
    $region34: #{tpu_custom_call.1} parent=5 // pred_check_branch
      %229 = sbr.rel (%p227) target = $region36
    $region35: #{tpu_custom_call.1} parent=5 // pred_region
      // Predicated region
      $region37: #{tpu_custom_call.1} parent=35 // pred_check
        %p230 = pneg %p33
      $region38: #{tpu_custom_call.1} parent=35 // pred_check_branch
        %232 = sbr.rel (%p230) target = $region40
      $region39: #{tpu_custom_call.1} parent=35 // pred_region
        %p233 = scmp.lt.s32.totalorder %s13, 1
        %s234 = scalar_select %p233, %s13, 1
        %s235 = smul.addr %s234, 12
        %s236 = smul.addr %s235, 8
        %s237 = scalar_lea.vmem %s0, %s236
      $region40: #{tpu_custom_call.1} parent=35 // pred_fallthru
        _
      // Predicated region
      $region41: #{tpu_custom_call.1} parent=35 // pred_check
        %p238 = pneg %p59
      $region42: #{tpu_custom_call.1} parent=35 // pred_check_branch
        %240 = sbr.rel (%p238) target = $region44
      $region43: #{tpu_custom_call.1} parent=35 // pred_region
        %p241 = scmp.lt.s32.totalorder %s13, 1
        %s242 = scalar_select %p241, %s13, 1
        %s243 = smul.addr %s242, 2
        %s244 = scalar_lea.vmem %s1, %s243
      $region44: #{tpu_custom_call.1} parent=35 // pred_fallthru
        _
    $region36: #{tpu_custom_call.1} parent=5 // pred_fallthru
      _
    %p245 = scmp.le.s32.totalorder 1, %s13
    %p246 = scmp.lt.s32.totalorder %s13, 3
    %p247 = pnand %p245, %p246
    %p248 = pneg %p247
    // Predicated region
    $region45: #{tpu_custom_call.1} parent=5 // pred_check
      _
    $region46: #{tpu_custom_call.1} parent=5 // pred_check_branch
      %250 = sbr.rel (%p247) target = $region48
    $region47: #{tpu_custom_call.1} parent=5 // pred_region
      %s251 = ssub.s32 %s13, 1
      %p252 = scmp.lt.s32.totalorder %s18, 1
      %s253 = scalar_select %p252, %s18, 1
      %s254 = smul.addr %s253, 12
      %s255 = smul.addr %s254, 8
      %s256 = scalar_lea.vmem %s0, %s255
      %p257 = pneg %p39
      %p258 = pneg %p36
      %p259 = scmp.lt.s32.totalorder %s18, 1
      %s260 = scalar_select %p259, %s18, 1
      %s261 = smul.addr %s260, 2
      %s262 = scalar_lea.vmem %s1, %s261
      %p263 = pneg %p65
      %p264 = pneg %p62
      %p265 = pneg %p86
      %p266 = pneg %p83
      %p267 = pneg %p107
      %p268 = pneg %p104
      %p269 = pneg %p128
      %p270 = pneg %p125
      %p271 = pneg %p149
      %p272 = pneg %p146
      %p273 = pneg %p170
      %p274 = pneg %p167
      %p275 = pneg %p196
      %p276 = pneg %p193
      %s277 = smul.u32 4, %s18
      %p278 = scmp.lt.s32.totalorder %s277, 7
      %s279 = scalar_select %p278, %s277, 7
      %s280 = smul.addr %s279, 8
      %s281 = scalar_lea.vmem %s7, %s280
      %p282 = scmp.lt.s32.totalorder %s18, 1
      %s283 = scalar_select %p282, %s18, 1
      %s284 = smul.addr %s283, 12
      %s285 = smul.addr %s284, 8
      %s286 = scalar_lea.vmem %s0, %s285
      %p287 = scmp.lt.s32.totalorder %s18, 1
      %s288 = scalar_select %p287, %s18, 1
      %s289 = smul.addr %s288, 2
      %s290 = scalar_lea.vmem %s1, %s289
      %s291 = smul.u32 4, %s18
      %p292 = scmp.lt.s32.totalorder %s291, 7
      %s293 = scalar_select %p292, %s291, 7
      %s294 = smul.addr %s293, 8
      %s295 = scalar_lea.vmem %s7, %s294
      %s296 = smul.u32 4, %s18
      %v297 = vld [vmem:[%s6] sm:$0x1]
      %v298 = vld [vmem:[%s6 + $0x1] sm:$0x1]
      %v299 = vld [vmem:[%s6 + $0x2] sm:$0x1]
      %v300 = vld [vmem:[%s286] sm:$0xff]
      %v301 = vld [vmem:[%s286 + $0x8] sm:$0xff]
      %v302 = vld [vmem:[%s286 + $0x10] sm:$0xff]
      %v303 = vld [vmem:[%s286 + $0x18] sm:$0xff]
      %v304 = vld [vmem:[%s286 + $0x20] sm:$0xff]
      %v305 = vld [vmem:[%s286 + $0x28] sm:$0xff]
      %v306 = vld [vmem:[%s286 + $0x30] sm:$0xff]
      %v307 = vld [vmem:[%s286 + $0x38] sm:$0xff]
      %v308 = vld [vmem:[%s286 + $0x40] sm:$0xff]
      %v309 = vld [vmem:[%s286 + $0x48] sm:$0xff]
      %v310 = vld [vmem:[%s286 + $0x50] sm:$0xff]
      %v311 = vld [vmem:[%s286 + $0x58] sm:$0xff]
      %v312 = vld [vmem:[%s2] sm:$0xff]
      %v313 = vlaneseq
      %v314 = vshrl.u32 %v313, 7
      %v315 = vsub.s32 0, %v314
      %v316 = vrot.slane %v297, %v315
      %vm317 = vcmask 64512
      %v319 = vsel %vm317, %v300, 0
      %v322 = vsel %vm317, %v301, 0
      %v325 = vsel %vm317, %v302, 0
      %v328 = vsel %vm317, %v303, 0
      %v331 = vsel %vm317, %v304, 0
      %v334 = vsel %vm317, %v305, 0
      %v337 = vsel %vm317, %v306, 0
      %v340 = vsel %vm317, %v307, 0
      %v343 = vsel %vm317, %v308, 0
      %v346 = vsel %vm317, %v309, 0
      %v349 = vsel %vm317, %v310, 0
      %v352 = vsel %vm317, %v311, 0
      %354 = vmatprep.subr.mxu0 0.0
      %355 = vmatpush1.msra.mxu0 %v312
      %356 = vmatprep.subr.mxu0 0.0
      %357 = vmatpush1.msra.mxu0 0.0
      %358 = vmatprep.subr.mxu0 0.0
      %359 = vmatpush1.msra.mxu0 0.0
      %360 = vmatprep.subr.mxu0 0.0
      %361 = vmatpush1.msra.mxu0 0.0
      %362 = vmatprep.subr.mxu0 0.0
      %363 = vmatpush1.msra.mxu0 0.0
      %364 = vmatprep.subr.mxu0 0.0
      %365 = vmatpush1.msra.mxu0 0.0
      %366 = vmatprep.subr.mxu0 0.0
      %367 = vmatpush1.msra.mxu0 0.0
      %368 = vmatprep.subr.mxu0 0.0
      %369 = vmatpush1.msra.mxu0 0.0
      %370 = vmatprep.subr.mxu0 0.0
      %371 = vmatpush1.msra.mxu0 0.0
      %372 = vmatprep.subr.mxu0 0.0
      %373 = vmatpush1.msra.mxu0 0.0
      %374 = vmatprep.subr.mxu0 0.0
      %375 = vmatpush1.msra.mxu0 0.0
      %376 = vmatprep.subr.mxu0 0.0
      %377 = vmatpush1.msra.mxu0 0.0
      %378 = vmatprep.subr.mxu0 0.0
      %379 = vmatpush1.msra.mxu0 0.0
      %380 = vmatprep.subr.mxu0 0.0
      %381 = vmatpush1.msra.mxu0 0.0
      %382 = vmatprep.subr.mxu0 0.0
      %383 = vmatpush1.msra.mxu0 0.0
      %384 = vmatprep.subr.mxu0 0.0
      %385 = vmatpush1.msra.mxu0 0.0
      %386 = vmatprep.subr.mxu0 0.0
      %387 = vmatpush1.msra.mxu0 0.0
      %388 = vmatprep.subr.mxu0 0.0
      %389 = vmatpush1.msra.mxu0 0.0
      %390 = vmatprep.subr.mxu0 0.0
      %391 = vmatpush1.msra.mxu0 0.0
      %392 = vmatprep.subr.mxu0 0.0
      %393 = vmatpush1.msra.mxu0 0.0
      %394 = vmatprep.subr.mxu0 0.0
      %395 = vmatpush1.msra.mxu0 0.0
      %396 = vmatprep.subr.mxu0 0.0
      %397 = vmatpush1.msra.mxu0 0.0
      %398 = vmatprep.subr.mxu0 0.0
      %399 = vmatpush1.msra.mxu0 0.0
      %400 = vmatprep.subr.mxu0 0.0
      %401 = vmatpush1.msra.mxu0 0.0
      %402 = vmatprep.subr.mxu0 0.0
      %403 = vmatpush1.msra.mxu0 0.0
      %404 = vmatprep.subr.mxu0 0.0
      %405 = vmatpush1.msra.mxu0 0.0
      %406 = vmatprep.subr.mxu0 0.0
      %407 = vmatpush1.msra.mxu0 0.0
      %408 = vmatprep.subr.mxu0 0.0
      %409 = vmatpush1.msra.mxu0 0.0
      %410 = vmatprep.subr.mxu0 0.0
      %411 = vmatpush1.msra.mxu0 0.0
      %412 = vmatprep.subr.mxu0 0.0
      %413 = vmatpush1.msra.mxu0 0.0
      %414 = vmatprep.subr.mxu0 0.0
      %415 = vmatpush1.msra.mxu0 0.0
      %416 = vmatprep.subr.mxu0 0.0
      %417 = vmatpush1.msra.mxu0 0.0
      %418 = vmatprep.mubr.f32.mxu0 0.0
      %419 = vmatmul.mubr.f32.gmra.mrb[0].mxu0 %v319
      %v420 = vpop.f32.mrb[0].mxu0
      %v421 = vadd.f32 %v316, %v420
      %v422 = vpop.f32.mrb[0].mxu0
      %423 = vmatprep.mubr.f32.mxu0 0.0
      %424 = vmatmul.mubr.f32.gmra.mrb[0].mxu0 %v322
      %v425 = vpop.f32.mrb[0].mxu0
      %v426 = vadd.f32 %v316, %v425
      %v427 = vpop.f32.mrb[0].mxu0
      %428 = vmatprep.mubr.f32.mxu0 0.0
      %429 = vmatmul.mubr.f32.gmra.mrb[0].mxu0 %v325
      %v430 = vpop.f32.mrb[0].mxu0
      %v431 = vadd.f32 %v316, %v430
      %v432 = vpop.f32.mrb[0].mxu0
      %433 = vmatprep.mubr.f32.mxu0 0.0
      %434 = vmatmul.mubr.f32.gmra.mrb[0].mxu0 %v328
      %v435 = vpop.f32.mrb[0].mxu0
      %v436 = vadd.f32 %v316, %v435
      %v437 = vpop.f32.mrb[0].mxu0
      %438 = vmatprep.mubr.f32.mxu0 0.0
      %439 = vmatmul.mubr.f32.gmra.mrb[0].mxu0 %v331
      %v440 = vpop.f32.mrb[0].mxu0
      %v441 = vadd.f32 %v316, %v440
      %v442 = vpop.f32.mrb[0].mxu0
      %443 = vmatprep.mubr.f32.mxu0 0.0
      %444 = vmatmul.mubr.f32.gmra.mrb[0].mxu0 %v334
      %v445 = vpop.f32.mrb[0].mxu0
      %v446 = vadd.f32 %v316, %v445
      %v447 = vpop.f32.mrb[0].mxu0
      %448 = vmatprep.mubr.f32.mxu0 0.0
      %449 = vmatmul.mubr.f32.gmra.mrb[0].mxu0 %v337
      %v450 = vpop.f32.mrb[0].mxu0
      %v451 = vadd.f32 %v316, %v450
      %v452 = vpop.f32.mrb[0].mxu0
      %453 = vmatprep.mubr.f32.mxu0 0.0
      %454 = vmatmul.mubr.f32.gmra.mrb[0].mxu0 %v340
      %v455 = vpop.f32.mrb[0].mxu0
      %v456 = vadd.f32 %v316, %v455
      %v457 = vpop.f32.mrb[0].mxu0
      %458 = vmatprep.mubr.f32.mxu0 0.0
      %459 = vmatmul.mubr.f32.gmra.mrb[0].mxu0 %v343
      %v460 = vpop.f32.mrb[0].mxu0
      %v461 = vadd.f32 %v316, %v460
      %v462 = vpop.f32.mrb[0].mxu0
      %463 = vmatprep.mubr.f32.mxu0 0.0
      %464 = vmatmul.mubr.f32.gmra.mrb[0].mxu0 %v346
      %v465 = vpop.f32.mrb[0].mxu0
      %v466 = vadd.f32 %v316, %v465
      %v467 = vpop.f32.mrb[0].mxu0
      %468 = vmatprep.mubr.f32.mxu0 0.0
      %469 = vmatmul.mubr.f32.gmra.mrb[0].mxu0 %v349
      %v470 = vpop.f32.mrb[0].mxu0
      %v471 = vadd.f32 %v316, %v470
      %v472 = vpop.f32.mrb[0].mxu0
      %473 = vmatprep.mubr.f32.mxu0 0.0
      %474 = vmatmul.mubr.f32.gmra.mrb[0].mxu0 %v352
      %v475 = vpop.f32.mrb[0].mxu0
      %v476 = vadd.f32 %v316, %v475
      %v477 = vpop.f32.mrb[0].mxu0
      %478 = vdwg.mxu0
      %v479 = vlaneseq
      %v480 = vshrl.u32 %v479, 7
      %v481 = vadd.s32 %v480, 8
      %v482 = vadd.s32 %v480, 16
      %v483 = vadd.s32 %v480, 24
      %v484 = vld [vmem:[%s290] sm:$0x1]
      %v485 = vlaneseq
      %v486 = vshrl.u32 %v485, 7
      %v487 = vsub.s32 0, %v486
      %v488 = vrot.slane %v484, %v487
      %vm489 = vcmp.eq.s32.totalorder %v480, %v488
      %vm490 = vcmp.eq.s32.totalorder %v481, %v488
      %vm491 = vcmp.eq.s32.totalorder %v482, %v488
      %vm492 = vcmp.eq.s32.totalorder %v483, %v488
      %v493 = vsel %vm489, 1, 0
      %v494 = vsel %vm490, 1, 0
      %v495 = vsel %vm491, 1, 0
      %v496 = vsel %vm492, 1, 0
      %v497 = vcvt.s32.f32 %v493
      %v498 = vcvt.s32.f32 %v494
      %v499 = vcvt.s32.f32 %v495
      %v500 = vcvt.s32.f32 %v496
      %v501 = vld [vmem:[%s290 + $0x1] sm:$0x1]
      %v502 = vlaneseq
      %v503 = vshrl.u32 %v502, 7
      %v504 = vsub.s32 0, %v503
      %v505 = vrot.slane %v501, %v504
      %vm506 = vcmp.eq.s32.totalorder %v480, %v505
      %vm507 = vcmp.eq.s32.totalorder %v481, %v505
      %vm508 = vcmp.eq.s32.totalorder %v482, %v505
      %vm509 = vcmp.eq.s32.totalorder %v483, %v505
      %v510 = vsel %vm506, 1, 0
      %v511 = vsel %vm507, 1, 0
      %v512 = vsel %vm508, 1, 0
      %v513 = vsel %vm509, 1, 0
      %v514 = vcvt.s32.f32 %v510
      %v515 = vcvt.s32.f32 %v511
      %v516 = vcvt.s32.f32 %v512
      %v517 = vcvt.s32.f32 %v513
      %518 = vxpose.xlu0.b32.start [1/16] %v497, 128
      %519 = vxpose.xlu0.b32.cont [2/16] %v498, 128
      %520 = vxpose.xlu0.b32.cont [3/16] %v499, 128
      %521 = vxpose.xlu0.b32.cont [4/16] %v500, 128
      %522 = vxpose.xlu0.b32.cont [5/16] 0.0, 128
      %523 = vxpose.xlu0.b32.cont [6/16] 0.0, 128
      %524 = vxpose.xlu0.b32.cont [7/16] 0.0, 128
      %525 = vxpose.xlu0.b32.cont [8/16] 0.0, 128
      %526 = vxpose.xlu0.b32.cont [9/16] 0.0, 128
      %527 = vxpose.xlu0.b32.cont [10/16] 0.0, 128
      %528 = vxpose.xlu0.b32.cont [11/16] 0.0, 128
      %529 = vxpose.xlu0.b32.cont [12/16] 0.0, 128
      %530 = vxpose.xlu0.b32.cont [13/16] 0.0, 128
      %531 = vxpose.xlu0.b32.cont [14/16] 0.0, 128
      %532 = vxpose.xlu0.b32.cont [15/16] 0.0, 128
      %533 = vxpose.xlu0.b32.end [16/16] 0.0, 128
      %v534 = vpop.trf.xlu0
      %v535 = vpop.trf.xlu0
      %v536 = vpop.trf.xlu0
      %v537 = vpop.trf.xlu0
      %v538 = vpop.trf.xlu0
      %v539 = vpop.trf.xlu0
      %v540 = vpop.trf.xlu0
      %v541 = vpop.trf.xlu0
      %v542 = vpop.trf.xlu0
      %v543 = vpop.trf.xlu0
      %v544 = vpop.trf.xlu0
      %v545 = vpop.trf.xlu0
      %v546 = vpop.trf.xlu0
      %v547 = vpop.trf.xlu0
      %v548 = vpop.trf.xlu0
      %v549 = vpop.trf.xlu0
      %vm550 = vcmask 261120
      %v552 = vsel %vm550, %v534, 0
      %v555 = vsel %vm550, %v535, 0
      %v558 = vsel %vm550, %v536, 0
      %v561 = vsel %vm550, %v537, 0
      %v564 = vsel %vm550, %v538, 0
      %v567 = vsel %vm550, %v539, 0
      %v570 = vsel %vm550, %v540, 0
      %v573 = vsel %vm550, %v541, 0
      %575 = vmatprep.subr.mxu0 0.0
      %576 = vmatpush1.msra.mxu0 %v421
      %577 = vmatprep.subr.mxu0 0.0
      %578 = vmatpush1.msra.mxu0 %v426
      %579 = vmatprep.subr.mxu0 0.0
      %580 = vmatpush1.msra.mxu0 %v431
      %581 = vmatprep.subr.mxu0 0.0
      %582 = vmatpush1.msra.mxu0 %v436
      %583 = vmatprep.subr.mxu0 0.0
      %584 = vmatpush1.msra.mxu0 0.0
      %585 = vmatprep.subr.mxu0 0.0
      %586 = vmatpush1.msra.mxu0 0.0
      %587 = vmatprep.subr.mxu0 0.0
      %588 = vmatpush1.msra.mxu0 0.0
      %589 = vmatprep.subr.mxu0 0.0
      %590 = vmatpush1.msra.mxu0 0.0
      %591 = vmatprep.subr.mxu0 0.0
      %592 = vmatpush1.msra.mxu0 0.0
      %593 = vmatprep.subr.mxu0 0.0
      %594 = vmatpush1.msra.mxu0 0.0
      %595 = vmatprep.subr.mxu0 0.0
      %596 = vmatpush1.msra.mxu0 0.0
      %597 = vmatprep.subr.mxu0 0.0
      %598 = vmatpush1.msra.mxu0 0.0
      %599 = vmatprep.subr.mxu0 0.0
      %600 = vmatpush1.msra.mxu0 0.0
      %601 = vmatprep.subr.mxu0 0.0
      %602 = vmatpush1.msra.mxu0 0.0
      %603 = vmatprep.subr.mxu0 0.0
      %604 = vmatpush1.msra.mxu0 0.0
      %605 = vmatprep.subr.mxu0 0.0
      %606 = vmatpush1.msra.mxu0 0.0
      %607 = vmatprep.subr.mxu0 0.0
      %608 = vmatpush1.msra.mxu0 0.0
      %609 = vmatprep.subr.mxu0 0.0
      %610 = vmatpush1.msra.mxu0 0.0
      %611 = vmatprep.subr.mxu0 0.0
      %612 = vmatpush1.msra.mxu0 0.0
      %613 = vmatprep.subr.mxu0 0.0
      %614 = vmatpush1.msra.mxu0 0.0
      %615 = vmatprep.subr.mxu0 0.0
      %616 = vmatpush1.msra.mxu0 0.0
      %617 = vmatprep.subr.mxu0 0.0
      %618 = vmatpush1.msra.mxu0 0.0
      %619 = vmatprep.subr.mxu0 0.0
      %620 = vmatpush1.msra.mxu0 0.0
      %621 = vmatprep.subr.mxu0 0.0
      %622 = vmatpush1.msra.mxu0 0.0
      %623 = vmatprep.subr.mxu0 0.0
      %624 = vmatpush1.msra.mxu0 0.0
      %625 = vmatprep.subr.mxu0 0.0
      %626 = vmatpush1.msra.mxu0 0.0
      %627 = vmatprep.subr.mxu0 0.0
      %628 = vmatpush1.msra.mxu0 0.0
      %629 = vmatprep.subr.mxu0 0.0
      %630 = vmatpush1.msra.mxu0 0.0
      %631 = vmatprep.subr.mxu0 0.0
      %632 = vmatpush1.msra.mxu0 0.0
      %633 = vmatprep.subr.mxu0 0.0
      %634 = vmatpush1.msra.mxu0 0.0
      %635 = vmatprep.subr.mxu0 0.0
      %636 = vmatpush1.msra.mxu0 0.0
      %637 = vmatprep.subr.mxu0 0.0
      %638 = vmatpush1.msra.mxu0 0.0
      %639 = vmatprep.mubr.f32.mxu0 0.0
      %640 = vmatmul.mubr.f32.gmra.mrb[0].mxu0 %v552
      %v641 = vpop.f32.mrb[0].mxu0
      %v642 = vadd.f32 0.0, %v641
      %v643 = vpop.f32.mrb[0].mxu0
      %644 = vmatprep.mubr.f32.mxu0 0.0
      %645 = vmatmul.mubr.f32.gmra.mrb[0].mxu0 %v555
      %v646 = vpop.f32.mrb[0].mxu0
      %v647 = vadd.f32 0.0, %v646
      %v648 = vpop.f32.mrb[0].mxu0
      %649 = vmatprep.mubr.f32.mxu0 0.0
      %650 = vmatmul.mubr.f32.gmra.mrb[0].mxu0 %v558
      %v651 = vpop.f32.mrb[0].mxu0
      %v652 = vadd.f32 0.0, %v651
      %v653 = vpop.f32.mrb[0].mxu0
      %654 = vmatprep.mubr.f32.mxu0 0.0
      %655 = vmatmul.mubr.f32.gmra.mrb[0].mxu0 %v561
      %v656 = vpop.f32.mrb[0].mxu0
      %v657 = vadd.f32 0.0, %v656
      %v658 = vpop.f32.mrb[0].mxu0
      %659 = vmatprep.mubr.f32.mxu0 0.0
      %660 = vmatmul.mubr.f32.gmra.mrb[0].mxu0 %v564
      %v661 = vpop.f32.mrb[0].mxu0
      %v662 = vadd.f32 0.0, %v661
      %v663 = vpop.f32.mrb[0].mxu0
      %664 = vmatprep.mubr.f32.mxu0 0.0
      %665 = vmatmul.mubr.f32.gmra.mrb[0].mxu0 %v567
      %v666 = vpop.f32.mrb[0].mxu0
      %v667 = vadd.f32 0.0, %v666
      %v668 = vpop.f32.mrb[0].mxu0
      %669 = vmatprep.mubr.f32.mxu0 0.0
      %670 = vmatmul.mubr.f32.gmra.mrb[0].mxu0 %v570
      %v671 = vpop.f32.mrb[0].mxu0
      %v672 = vadd.f32 0.0, %v671
      %v673 = vpop.f32.mrb[0].mxu0
      %674 = vmatprep.mubr.f32.mxu0 0.0
      %675 = vmatmul.mubr.f32.gmra.mrb[0].mxu0 %v573
      %v676 = vpop.f32.mrb[0].mxu0
      %v677 = vadd.f32 0.0, %v676
      %v678 = vpop.f32.mrb[0].mxu0
      %679 = vdwg.mxu0
      %v680 = vmul.f32 %v642, %v441
      %v681 = vmul.f32 %v647, %v446
      %v682 = vmul.f32 %v652, %v451
      %v683 = vmul.f32 %v657, %v456
      %v684 = vmul.f32 %v662, %v461
      %v685 = vmul.f32 %v667, %v466
      %v686 = vmul.f32 %v672, %v471
      %v687 = vmul.f32 %v677, %v476
      %vm688 = vcmask 523264
      %v690 = vsel %vm688, %v514, 0
      %v693 = vsel %vm688, %v515, 0
      %v696 = vsel %vm688, %v516, 0
      %v699 = vsel %vm688, %v517, 0
      %701 = vmatprep.subr.mxu0 0.0
      %702 = vmatpush1.msra.mxu0 %v680
      %703 = vmatprep.subr.mxu0 0.0
      %704 = vmatpush1.msra.mxu0 %v681
      %705 = vmatprep.subr.mxu0 0.0
      %706 = vmatpush1.msra.mxu0 %v682
      %707 = vmatprep.subr.mxu0 0.0
      %708 = vmatpush1.msra.mxu0 %v683
      %709 = vmatprep.subr.mxu0 0.0
      %710 = vmatpush1.msra.mxu0 %v684
      %711 = vmatprep.subr.mxu0 0.0
      %712 = vmatpush1.msra.mxu0 %v685
      %713 = vmatprep.subr.mxu0 0.0
      %714 = vmatpush1.msra.mxu0 %v686
      %715 = vmatprep.subr.mxu0 0.0
      %716 = vmatpush1.msra.mxu0 %v687
      %717 = vmatprep.subr.mxu0 0.0
      %718 = vmatpush1.msra.mxu0 0.0
      %719 = vmatprep.subr.mxu0 0.0
      %720 = vmatpush1.msra.mxu0 0.0
      %721 = vmatprep.subr.mxu0 0.0
      %722 = vmatpush1.msra.mxu0 0.0
      %723 = vmatprep.subr.mxu0 0.0
      %724 = vmatpush1.msra.mxu0 0.0
      %725 = vmatprep.subr.mxu0 0.0
      %726 = vmatpush1.msra.mxu0 0.0
      %727 = vmatprep.subr.mxu0 0.0
      %728 = vmatpush1.msra.mxu0 0.0
      %729 = vmatprep.subr.mxu0 0.0
      %730 = vmatpush1.msra.mxu0 0.0
      %731 = vmatprep.subr.mxu0 0.0
      %732 = vmatpush1.msra.mxu0 0.0
      %733 = vmatprep.subr.mxu0 0.0
      %734 = vmatpush1.msra.mxu0 0.0
      %735 = vmatprep.subr.mxu0 0.0
      %736 = vmatpush1.msra.mxu0 0.0
      %737 = vmatprep.subr.mxu0 0.0
      %738 = vmatpush1.msra.mxu0 0.0
      %739 = vmatprep.subr.mxu0 0.0
      %740 = vmatpush1.msra.mxu0 0.0
      %741 = vmatprep.subr.mxu0 0.0
      %742 = vmatpush1.msra.mxu0 0.0
      %743 = vmatprep.subr.mxu0 0.0
      %744 = vmatpush1.msra.mxu0 0.0
      %745 = vmatprep.subr.mxu0 0.0
      %746 = vmatpush1.msra.mxu0 0.0
      %747 = vmatprep.subr.mxu0 0.0
      %748 = vmatpush1.msra.mxu0 0.0
      %749 = vmatprep.subr.mxu0 0.0
      %750 = vmatpush1.msra.mxu0 0.0
      %751 = vmatprep.subr.mxu0 0.0
      %752 = vmatpush1.msra.mxu0 0.0
      %753 = vmatprep.subr.mxu0 0.0
      %754 = vmatpush1.msra.mxu0 0.0
      %755 = vmatprep.subr.mxu0 0.0
      %756 = vmatpush1.msra.mxu0 0.0
      %757 = vmatprep.subr.mxu0 0.0
      %758 = vmatpush1.msra.mxu0 0.0
      %759 = vmatprep.subr.mxu0 0.0
      %760 = vmatpush1.msra.mxu0 0.0
      %761 = vmatprep.subr.mxu0 0.0
      %762 = vmatpush1.msra.mxu0 0.0
      %763 = vmatprep.subr.mxu0 0.0
      %764 = vmatpush1.msra.mxu0 0.0
      %765 = vmatprep.mubr.f32.mxu0 0.0
      %766 = vmatmul.mubr.f32.gmra.mrb[0].mxu0 %v690
      %v767 = vpop.f32.mrb[0].mxu0
      %v768 = vadd.f32 %v421, %v767
      %v769 = vpop.f32.mrb[0].mxu0
      %770 = vmatprep.mubr.f32.mxu0 0.0
      %771 = vmatmul.mubr.f32.gmra.mrb[0].mxu0 %v693
      %v772 = vpop.f32.mrb[0].mxu0
      %v773 = vadd.f32 %v426, %v772
      %v774 = vpop.f32.mrb[0].mxu0
      %775 = vmatprep.mubr.f32.mxu0 0.0
      %776 = vmatmul.mubr.f32.gmra.mrb[0].mxu0 %v696
      %v777 = vpop.f32.mrb[0].mxu0
      %v778 = vadd.f32 %v431, %v777
      %v779 = vpop.f32.mrb[0].mxu0
      %780 = vmatprep.mubr.f32.mxu0 0.0
      %781 = vmatmul.mubr.f32.gmra.mrb[0].mxu0 %v699
      %v782 = vpop.f32.mrb[0].mxu0
      %v783 = vadd.f32 %v436, %v782
      %v784 = vpop.f32.mrb[0].mxu0
      %785 = vdwg.mxu0
      %vm786 = vcmp.ge.f32.partialorder %v768, 0.0
      %vm787 = vcmp.ge.f32.partialorder %v773, 0.0
      %vm788 = vcmp.ge.f32.partialorder %v778, 0.0
      %vm789 = vcmp.ge.f32.partialorder %v783, 0.0
      %v790 = vmul.f32 %v768, 0.01
      %v791 = vmul.f32 %v773, 0.01
      %v792 = vmul.f32 %v778, 0.01
      %v793 = vmul.f32 %v783, 0.01
      %v794 = vsel %vm786, %v768, %v790
      %v795 = vsel %vm787, %v773, %v791
      %v796 = vsel %vm788, %v778, %v792
      %v797 = vsel %vm789, %v783, %v793
      %v798 = vlaneseq
      %v799 = vand.u32 %v798, 127
      %v800 = vmul.u32 %v799, 8
      %vm801 = vcmp.ge.s32.totalorder %v480, %v800
      %vm802 = vcmp.ge.s32.totalorder %v481, %v800
      %vm803 = vcmp.ge.s32.totalorder %v482, %v800
      %vm804 = vcmp.ge.s32.totalorder %v483, %v800
      %v805 = vadd.s32 %v799, 1
      %v806 = vmul.u32 %v805, 8
      %vm807 = vcmp.lt.s32.totalorder %v480, %v806
      %vm808 = vcmp.lt.s32.totalorder %v481, %v806
      %vm809 = vcmp.lt.s32.totalorder %v482, %v806
      %vm810 = vcmp.lt.s32.totalorder %v483, %v806
      %vm811 = vmand %vm801, %vm807
      %vm812 = vmand %vm802, %vm808
      %vm813 = vmand %vm803, %vm809
      %vm814 = vmand %vm804, %vm810
      %v815 = vsel %vm811, 1, 0
      %v816 = vsel %vm812, 1, 0
      %v817 = vsel %vm813, 1, 0
      %v818 = vsel %vm814, 1, 0
      %v819 = vcvt.s32.f32 %v815
      %v820 = vcvt.s32.f32 %v816
      %v821 = vcvt.s32.f32 %v817
      %v822 = vcvt.s32.f32 %v818
      %vm823 = vcmask 31744
      %v825 = vsel %vm823, %v819, 0
      %v828 = vsel %vm823, %v820, 0
      %v831 = vsel %vm823, %v821, 0
      %v834 = vsel %vm823, %v822, 0
      %836 = vmatprep.subr.mxu0 0.0
      %837 = vmatpush1.xpose.msra.mxu0 %v825
      %838 = vmatprep.subr.mxu0 0.0
      %839 = vmatpush1.xpose.msra.mxu0 %v828
      %840 = vmatprep.subr.mxu0 0.0
      %841 = vmatpush1.xpose.msra.mxu0 %v831
      %842 = vmatprep.subr.mxu0 0.0
      %843 = vmatpush1.xpose.msra.mxu0 %v834
      %844 = vmatprep.subr.mxu0 0.0
      %845 = vmatpush1.xpose.msra.mxu0 0.0
      %846 = vmatprep.subr.mxu0 0.0
      %847 = vmatpush1.xpose.msra.mxu0 0.0
      %848 = vmatprep.subr.mxu0 0.0
      %849 = vmatpush1.xpose.msra.mxu0 0.0
      %850 = vmatprep.subr.mxu0 0.0
      %851 = vmatpush1.xpose.msra.mxu0 0.0
      %852 = vmatprep.subr.mxu0 0.0
      %853 = vmatpush1.xpose.msra.mxu0 0.0
      %854 = vmatprep.subr.mxu0 0.0
      %855 = vmatpush1.xpose.msra.mxu0 0.0
      %856 = vmatprep.subr.mxu0 0.0
      %857 = vmatpush1.xpose.msra.mxu0 0.0
      %858 = vmatprep.subr.mxu0 0.0
      %859 = vmatpush1.xpose.msra.mxu0 0.0
      %860 = vmatprep.subr.mxu0 0.0
      %861 = vmatpush1.xpose.msra.mxu0 0.0
      %862 = vmatprep.subr.mxu0 0.0
      %863 = vmatpush1.xpose.msra.mxu0 0.0
      %864 = vmatprep.subr.mxu0 0.0
      %865 = vmatpush1.xpose.msra.mxu0 0.0
      %866 = vmatprep.subr.mxu0 0.0
      %867 = vmatpush1.xpose.msra.mxu0 0.0
      %868 = vmatprep.subr.mxu0 0.0
      %869 = vmatpush1.xpose.msra.mxu0 0.0
      %870 = vmatprep.subr.mxu0 0.0
      %871 = vmatpush1.xpose.msra.mxu0 0.0
      %872 = vmatprep.subr.mxu0 0.0
      %873 = vmatpush1.xpose.msra.mxu0 0.0
      %874 = vmatprep.subr.mxu0 0.0
      %875 = vmatpush1.xpose.msra.mxu0 0.0
      %876 = vmatprep.subr.mxu0 0.0
      %877 = vmatpush1.xpose.msra.mxu0 0.0
      %878 = vmatprep.subr.mxu0 0.0
      %879 = vmatpush1.xpose.msra.mxu0 0.0
      %880 = vmatprep.subr.mxu0 0.0
      %881 = vmatpush1.xpose.msra.mxu0 0.0
      %882 = vmatprep.subr.mxu0 0.0
      %883 = vmatpush1.xpose.msra.mxu0 0.0
      %884 = vmatprep.subr.mxu0 0.0
      %885 = vmatpush1.xpose.msra.mxu0 0.0
      %886 = vmatprep.subr.mxu0 0.0
      %887 = vmatpush1.xpose.msra.mxu0 0.0
      %888 = vmatprep.subr.mxu0 0.0
      %889 = vmatpush1.xpose.msra.mxu0 0.0
      %890 = vmatprep.subr.mxu0 0.0
      %891 = vmatpush1.xpose.msra.mxu0 0.0
      %892 = vmatprep.subr.mxu0 0.0
      %893 = vmatpush1.xpose.msra.mxu0 0.0
      %894 = vmatprep.subr.mxu0 0.0
      %895 = vmatpush1.xpose.msra.mxu0 0.0
      %896 = vmatprep.subr.mxu0 0.0
      %897 = vmatpush1.xpose.msra.mxu0 0.0
      %898 = vmatprep.subr.mxu0 0.0
      %899 = vmatpush1.xpose.msra.mxu0 0.0
      %900 = vmatprep.mubr.f32.mxu0 0.0
      %901 = vmatmul.mubr.f32.gmra.mrb[0].mxu0 %v825
      %v902 = vpop.f32.mrb[0].mxu0
      %v903 = vadd.f32 0.0, %v902
      %v904 = vpop.f32.mrb[0].mxu0
      %905 = vmatprep.mubr.f32.mxu0 0.0
      %906 = vmatmul.mubr.f32.gmra.mrb[0].mxu0 %v828
      %v907 = vpop.f32.mrb[0].mxu0
      %v908 = vadd.f32 0.0, %v907
      %v909 = vpop.f32.mrb[0].mxu0
      %910 = vmatprep.mubr.f32.mxu0 0.0
      %911 = vmatmul.mubr.f32.gmra.mrb[0].mxu0 %v831
      %v912 = vpop.f32.mrb[0].mxu0
      %v913 = vadd.f32 0.0, %v912
      %v914 = vpop.f32.mrb[0].mxu0
      %915 = vmatprep.mubr.f32.mxu0 0.0
      %916 = vmatmul.mubr.f32.gmra.mrb[0].mxu0 %v834
      %v917 = vpop.f32.mrb[0].mxu0
      %v918 = vadd.f32 0.0, %v917
      %v919 = vpop.f32.mrb[0].mxu0
      %920 = vdwg.mxu0
      %v921 = vld [vmem:[%s3] sm:$0xff]
      %v922 = vld [vmem:[%s3 + $0x8] sm:$0xff]
      %vm923 = vcmask 130048
      %v925 = vsel %vm923, %v794, 0
      %v928 = vsel %vm923, %v795, 0
      %v931 = vsel %vm923, %v796, 0
      %v934 = vsel %vm923, %v797, 0
      %936 = vmatprep.subr.mxu0 0.0
      %937 = vmatpush1.msra.mxu0 %v921
      %938 = vmatprep.subr.mxu0 0.0
      %939 = vmatpush1.msra.mxu0 %v922
      %940 = vmatprep.subr.mxu0 0.0
      %941 = vmatpush1.msra.mxu0 0.0
      %942 = vmatprep.subr.mxu0 0.0
      %943 = vmatpush1.msra.mxu0 0.0
      %944 = vmatprep.subr.mxu0 0.0
      %945 = vmatpush1.msra.mxu0 0.0
      %946 = vmatprep.subr.mxu0 0.0
      %947 = vmatpush1.msra.mxu0 0.0
      %948 = vmatprep.subr.mxu0 0.0
      %949 = vmatpush1.msra.mxu0 0.0
      %950 = vmatprep.subr.mxu0 0.0
      %951 = vmatpush1.msra.mxu0 0.0
      %952 = vmatprep.subr.mxu0 0.0
      %953 = vmatpush1.msra.mxu0 0.0
      %954 = vmatprep.subr.mxu0 0.0
      %955 = vmatpush1.msra.mxu0 0.0
      %956 = vmatprep.subr.mxu0 0.0
      %957 = vmatpush1.msra.mxu0 0.0
      %958 = vmatprep.subr.mxu0 0.0
      %959 = vmatpush1.msra.mxu0 0.0
      %960 = vmatprep.subr.mxu0 0.0
      %961 = vmatpush1.msra.mxu0 0.0
      %962 = vmatprep.subr.mxu0 0.0
      %963 = vmatpush1.msra.mxu0 0.0
      %964 = vmatprep.subr.mxu0 0.0
      %965 = vmatpush1.msra.mxu0 0.0
      %966 = vmatprep.subr.mxu0 0.0
      %967 = vmatpush1.msra.mxu0 0.0
      %968 = vmatprep.subr.mxu0 0.0
      %969 = vmatpush1.msra.mxu0 0.0
      %970 = vmatprep.subr.mxu0 0.0
      %971 = vmatpush1.msra.mxu0 0.0
      %972 = vmatprep.subr.mxu0 0.0
      %973 = vmatpush1.msra.mxu0 0.0
      %974 = vmatprep.subr.mxu0 0.0
      %975 = vmatpush1.msra.mxu0 0.0
      %976 = vmatprep.subr.mxu0 0.0
      %977 = vmatpush1.msra.mxu0 0.0
      %978 = vmatprep.subr.mxu0 0.0
      %979 = vmatpush1.msra.mxu0 0.0
      %980 = vmatprep.subr.mxu0 0.0
      %981 = vmatpush1.msra.mxu0 0.0
      %982 = vmatprep.subr.mxu0 0.0
      %983 = vmatpush1.msra.mxu0 0.0
      %984 = vmatprep.subr.mxu0 0.0
      %985 = vmatpush1.msra.mxu0 0.0
      %986 = vmatprep.subr.mxu0 0.0
      %987 = vmatpush1.msra.mxu0 0.0
      %988 = vmatprep.subr.mxu0 0.0
      %989 = vmatpush1.msra.mxu0 0.0
      %990 = vmatprep.subr.mxu0 0.0
      %991 = vmatpush1.msra.mxu0 0.0
      %992 = vmatprep.subr.mxu0 0.0
      %993 = vmatpush1.msra.mxu0 0.0
      %994 = vmatprep.subr.mxu0 0.0
      %995 = vmatpush1.msra.mxu0 0.0
      %996 = vmatprep.subr.mxu0 0.0
      %997 = vmatpush1.msra.mxu0 0.0
      %998 = vmatprep.subr.mxu0 0.0
      %999 = vmatpush1.msra.mxu0 0.0
      %1000 = vmatprep.mubr.f32.mxu0 0.0
      %1001 = vmatmul.mubr.f32.gmra.mrb[0].mxu0 %v925
      %v1002 = vpop.f32.mrb[0].mxu0
      %v1003 = vadd.f32 0.0, %v1002
      %v1004 = vpop.f32.mrb[0].mxu0
      %1005 = vmatprep.mubr.f32.mxu0 0.0
      %1006 = vmatmul.mubr.f32.gmra.mrb[0].mxu0 %v928
      %v1007 = vpop.f32.mrb[0].mxu0
      %v1008 = vadd.f32 0.0, %v1007
      %v1009 = vpop.f32.mrb[0].mxu0
      %1010 = vmatprep.mubr.f32.mxu0 0.0
      %1011 = vmatmul.mubr.f32.gmra.mrb[0].mxu0 %v931
      %v1012 = vpop.f32.mrb[0].mxu0
      %v1013 = vadd.f32 0.0, %v1012
      %v1014 = vpop.f32.mrb[0].mxu0
      %1015 = vmatprep.mubr.f32.mxu0 0.0
      %1016 = vmatmul.mubr.f32.gmra.mrb[0].mxu0 %v934
      %v1017 = vpop.f32.mrb[0].mxu0
      %v1018 = vadd.f32 0.0, %v1017
      %v1019 = vpop.f32.mrb[0].mxu0
      %1020 = vdwg.mxu0
      %1025 = vrot.lane.b32.xlu0 %v1003, 96
      %v1026 = vpop.permute.xlu0 %1025
      %1027 = vrot.lane.b32.xlu0 %v1008, 96
      %v1028 = vpop.permute.xlu0 %1027
      %1029 = vrot.lane.b32.xlu0 %v1013, 96
      %v1030 = vpop.permute.xlu0 %1029
      %1031 = vrot.lane.b32.xlu0 %v1018, 96
      %v1032 = vpop.permute.xlu0 %1031
      %v1033 = vsel %vm550, %v1003, 0
      %v1035 = vsel %vm550, %v1008, 0
      %v1037 = vsel %vm550, %v1013, 0
      %v1039 = vsel %vm550, %v1018, 0
      %v1041 = vsel %vm550, %v1026, 0
      %v1043 = vsel %vm550, %v1028, 0
      %v1045 = vsel %vm550, %v1030, 0
      %v1047 = vsel %vm550, %v1032, 0
      %1049 = vmatprep.subr.mxu0 0.0
      %1050 = vmatpush1.xpose.msra.mxu0 %v1041
      %1051 = vmatprep.subr.mxu0 0.0
      %1052 = vmatpush1.xpose.msra.mxu0 %v1043
      %1053 = vmatprep.subr.mxu0 0.0
      %1054 = vmatpush1.xpose.msra.mxu0 %v1045
      %1055 = vmatprep.subr.mxu0 0.0
      %1056 = vmatpush1.xpose.msra.mxu0 %v1047
      %1057 = vmatprep.subr.mxu0 0.0
      %1058 = vmatpush1.xpose.msra.mxu0 0.0
      %1059 = vmatprep.subr.mxu0 0.0
      %1060 = vmatpush1.xpose.msra.mxu0 0.0
      %1061 = vmatprep.subr.mxu0 0.0
      %1062 = vmatpush1.xpose.msra.mxu0 0.0
      %1063 = vmatprep.subr.mxu0 0.0
      %1064 = vmatpush1.xpose.msra.mxu0 0.0
      %1065 = vmatprep.subr.mxu0 0.0
      %1066 = vmatpush1.xpose.msra.mxu0 0.0
      %1067 = vmatprep.subr.mxu0 0.0
      %1068 = vmatpush1.xpose.msra.mxu0 0.0
      %1069 = vmatprep.subr.mxu0 0.0
      %1070 = vmatpush1.xpose.msra.mxu0 0.0
      %1071 = vmatprep.subr.mxu0 0.0
      %1072 = vmatpush1.xpose.msra.mxu0 0.0
      %1073 = vmatprep.subr.mxu0 0.0
      %1074 = vmatpush1.xpose.msra.mxu0 0.0
      %1075 = vmatprep.subr.mxu0 0.0
      %1076 = vmatpush1.xpose.msra.mxu0 0.0
      %1077 = vmatprep.subr.mxu0 0.0
      %1078 = vmatpush1.xpose.msra.mxu0 0.0
      %1079 = vmatprep.subr.mxu0 0.0
      %1080 = vmatpush1.xpose.msra.mxu0 0.0
      %1081 = vmatprep.subr.mxu0 0.0
      %1082 = vmatpush1.xpose.msra.mxu0 0.0
      %1083 = vmatprep.subr.mxu0 0.0
      %1084 = vmatpush1.xpose.msra.mxu0 0.0
      %1085 = vmatprep.subr.mxu0 0.0
      %1086 = vmatpush1.xpose.msra.mxu0 0.0
      %1087 = vmatprep.subr.mxu0 0.0
      %1088 = vmatpush1.xpose.msra.mxu0 0.0
      %1089 = vmatprep.subr.mxu0 0.0
      %1090 = vmatpush1.xpose.msra.mxu0 0.0
      %1091 = vmatprep.subr.mxu0 0.0
      %1092 = vmatpush1.xpose.msra.mxu0 0.0
      %1093 = vmatprep.subr.mxu0 0.0
      %1094 = vmatpush1.xpose.msra.mxu0 0.0
      %1095 = vmatprep.subr.mxu0 0.0
      %1096 = vmatpush1.xpose.msra.mxu0 0.0
      %1097 = vmatprep.subr.mxu0 0.0
      %1098 = vmatpush1.xpose.msra.mxu0 0.0
      %1099 = vmatprep.subr.mxu0 0.0
      %1100 = vmatpush1.xpose.msra.mxu0 0.0
      %1101 = vmatprep.subr.mxu0 0.0
      %1102 = vmatpush1.xpose.msra.mxu0 0.0
      %1103 = vmatprep.subr.mxu0 0.0
      %1104 = vmatpush1.xpose.msra.mxu0 0.0
      %1105 = vmatprep.subr.mxu0 0.0
      %1106 = vmatpush1.xpose.msra.mxu0 0.0
      %1107 = vmatprep.subr.mxu0 0.0
      %1108 = vmatpush1.xpose.msra.mxu0 0.0
      %1109 = vmatprep.subr.mxu0 0.0
      %1110 = vmatpush1.xpose.msra.mxu0 0.0
      %1111 = vmatprep.subr.mxu0 0.0
      %1112 = vmatpush1.xpose.msra.mxu0 0.0
      %1113 = vmatprep.mubr.f32.mxu0 0.0
      %1114 = vmatmul.mubr.f32.gmra.mrb[0].mxu0 %v1033
      %v1115 = vpop.f32.mrb[0].mxu0
      %v1116 = vadd.f32 0.0, %v1115
      %v1117 = vpop.f32.mrb[0].mxu0
      %1118 = vmatprep.mubr.f32.mxu0 0.0
      %1119 = vmatmul.mubr.f32.gmra.mrb[0].mxu0 %v1035
      %v1120 = vpop.f32.mrb[0].mxu0
      %v1121 = vadd.f32 0.0, %v1120
      %v1122 = vpop.f32.mrb[0].mxu0
      %1123 = vmatprep.mubr.f32.mxu0 0.0
      %1124 = vmatmul.mubr.f32.gmra.mrb[0].mxu0 %v1037
      %v1125 = vpop.f32.mrb[0].mxu0
      %v1126 = vadd.f32 0.0, %v1125
      %v1127 = vpop.f32.mrb[0].mxu0
      %1128 = vmatprep.mubr.f32.mxu0 0.0
      %1129 = vmatmul.mubr.f32.gmra.mrb[0].mxu0 %v1039
      %v1130 = vpop.f32.mrb[0].mxu0
      %v1131 = vadd.f32 0.0, %v1130
      %v1132 = vpop.f32.mrb[0].mxu0
      %1133 = vdwg.mxu0
      %vm1134 = vcmp.gt.f32.partialorder %v903, 0.5
      %vm1135 = vcmp.gt.f32.partialorder %v908, 0.5
      %vm1136 = vcmp.gt.f32.partialorder %v913, 0.5
      %vm1137 = vcmp.gt.f32.partialorder %v918, 0.5
      %v1138 = vsel %vm1134, %v1116, -1e+30
      %v1139 = vsel %vm1135, %v1121, -1e+30
      %v1140 = vsel %vm1136, %v1126, -1e+30
      %v1141 = vsel %vm1137, %v1131, -1e+30
      %v1142 = vsel %vm550, %v1138, -inf
      %1143 = vmax.xlane.f32.xlu0 %v1142
      %v1144 = vpop.xlane.xlu0 %1143
      %v1145 = vsel %vm550, %v1139, -inf
      %1146 = vmax.xlane.f32.xlu0 %v1145
      %v1147 = vpop.xlane.xlu0 %1146
      %v1148 = vsel %vm550, %v1140, -inf
      %1149 = vmax.xlane.f32.xlu0 %v1148
      %v1150 = vpop.xlane.xlu0 %1149
      %v1151 = vsel %vm550, %v1141, -inf
      %1152 = vmax.xlane.f32.xlu0 %v1151
      %v1153 = vpop.xlane.xlu0 %1152
      %v1154 = vsub.f32 %v1138, %v1144
      %v1155 = vsub.f32 %v1139, %v1147
      %v1156 = vsub.f32 %v1140, %v1150
      %v1157 = vsub.f32 %v1141, %v1153
      %v1158 = vmul.f32 %v1154, 1.442695
      %v1159 = vpow.pop %v1158
      %v1160 = vmul.f32 %v1155, 1.442695
      %v1161 = vpow.pop %v1160
      %v1162 = vmul.f32 %v1156, 1.442695
      %v1163 = vpow.pop %v1162
      %v1164 = vmul.f32 %v1157, 1.442695
      %v1165 = vpow.pop %v1164
      %v1166 = vsel %vm550, %v1159, 0.0
      %1167 = vadd.xlane.f32.xlu0 %v1166
      %v1168 = vpop.xlane.xlu0 %1167
      %v1169 = vsel %vm550, %v1161, 0.0
      %1170 = vadd.xlane.f32.xlu0 %v1169
      %v1171 = vpop.xlane.xlu0 %1170
      %v1172 = vsel %vm550, %v1163, 0.0
      %1173 = vadd.xlane.f32.xlu0 %v1172
      %v1174 = vpop.xlane.xlu0 %1173
      %v1175 = vsel %vm550, %v1165, 0.0
      %1176 = vadd.xlane.f32.xlu0 %v1175
      %v1177 = vpop.xlane.xlu0 %1176
      %v1178 = vrcp.pop %v1168
      %v1179 = vrcp.pop %v1171
      %v1180 = vrcp.pop %v1174
      %v1181 = vrcp.pop %v1177
      %v1182 = vmul.f32 %v1159, %v1178
      %v1183 = vmul.f32 %v1161, %v1179
      %v1184 = vmul.f32 %v1163, %v1180
      %v1185 = vmul.f32 %v1165, %v1181
      %1186 = vxpose.xlu0.b32.start [1/16] %v1182, 128
      %1187 = vxpose.xlu0.b32.cont [2/16] %v1183, 128
      %1188 = vxpose.xlu0.b32.cont [3/16] %v1184, 128
      %1189 = vxpose.xlu0.b32.cont [4/16] %v1185, 128
      %1190 = vxpose.xlu0.b32.cont [5/16] 0.0, 128
      %1191 = vxpose.xlu0.b32.cont [6/16] 0.0, 128
      %1192 = vxpose.xlu0.b32.cont [7/16] 0.0, 128
      %1193 = vxpose.xlu0.b32.cont [8/16] 0.0, 128
      %1194 = vxpose.xlu0.b32.cont [9/16] 0.0, 128
      %1195 = vxpose.xlu0.b32.cont [10/16] 0.0, 128
      %1196 = vxpose.xlu0.b32.cont [11/16] 0.0, 128
      %1197 = vxpose.xlu0.b32.cont [12/16] 0.0, 128
      %1198 = vxpose.xlu0.b32.cont [13/16] 0.0, 128
      %1199 = vxpose.xlu0.b32.cont [14/16] 0.0, 128
      %1200 = vxpose.xlu0.b32.cont [15/16] 0.0, 128
      %1201 = vxpose.xlu0.b32.end [16/16] 0.0, 128
      %v1202 = vpop.trf.xlu0
      %v1203 = vpop.trf.xlu0
      %v1204 = vpop.trf.xlu0
      %v1205 = vpop.trf.xlu0
      %v1206 = vpop.trf.xlu0
      %v1207 = vpop.trf.xlu0
      %v1208 = vpop.trf.xlu0
      %v1209 = vpop.trf.xlu0
      %v1210 = vpop.trf.xlu0
      %v1211 = vpop.trf.xlu0
      %v1212 = vpop.trf.xlu0
      %v1213 = vpop.trf.xlu0
      %v1214 = vpop.trf.xlu0
      %v1215 = vpop.trf.xlu0
      %v1216 = vpop.trf.xlu0
      %v1217 = vpop.trf.xlu0
      %1218 = vrot.lane.b32.xlu0 %v1003, 64
      %v1219 = vpop.permute.xlu0 %1218
      %1220 = vrot.lane.b32.xlu0 %v1008, 64
      %v1221 = vpop.permute.xlu0 %1220
      %1222 = vrot.lane.b32.xlu0 %v1013, 64
      %v1223 = vpop.permute.xlu0 %1222
      %1224 = vrot.lane.b32.xlu0 %v1018, 64
      %v1225 = vpop.permute.xlu0 %1224
      %v1231 = vsel %vm550, %v1202, 0
      %v1234 = vsel %vm550, %v1203, 0
      %v1237 = vsel %vm550, %v1204, 0
      %v1240 = vsel %vm550, %v1205, 0
      %1242 = vmatprep.subr.mxu0 0.0
      %1243 = vmatpush1.msra.mxu0 %v1219
      %1244 = vmatprep.subr.mxu0 0.0
      %1245 = vmatpush1.msra.mxu0 %v1221
      %1246 = vmatprep.subr.mxu0 0.0
      %1247 = vmatpush1.msra.mxu0 %v1223
      %1248 = vmatprep.subr.mxu0 0.0
      %1249 = vmatpush1.msra.mxu0 %v1225
      %1250 = vmatprep.subr.mxu0 0.0
      %1251 = vmatpush1.msra.mxu0 0.0
      %1252 = vmatprep.subr.mxu0 0.0
      %1253 = vmatpush1.msra.mxu0 0.0
      %1254 = vmatprep.subr.mxu0 0.0
      %1255 = vmatpush1.msra.mxu0 0.0
      %1256 = vmatprep.subr.mxu0 0.0
      %1257 = vmatpush1.msra.mxu0 0.0
      %1258 = vmatprep.subr.mxu0 0.0
      %1259 = vmatpush1.msra.mxu0 0.0
      %1260 = vmatprep.subr.mxu0 0.0
      %1261 = vmatpush1.msra.mxu0 0.0
      %1262 = vmatprep.subr.mxu0 0.0
      %1263 = vmatpush1.msra.mxu0 0.0
      %1264 = vmatprep.subr.mxu0 0.0
      %1265 = vmatpush1.msra.mxu0 0.0
      %1266 = vmatprep.subr.mxu0 0.0
      %1267 = vmatpush1.msra.mxu0 0.0
      %1268 = vmatprep.subr.mxu0 0.0
      %1269 = vmatpush1.msra.mxu0 0.0
      %1270 = vmatprep.subr.mxu0 0.0
      %1271 = vmatpush1.msra.mxu0 0.0
      %1272 = vmatprep.subr.mxu0 0.0
      %1273 = vmatpush1.msra.mxu0 0.0
      %1274 = vmatprep.subr.mxu0 0.0
      %1275 = vmatpush1.msra.mxu0 0.0
      %1276 = vmatprep.subr.mxu0 0.0
      %1277 = vmatpush1.msra.mxu0 0.0
      %1278 = vmatprep.subr.mxu0 0.0
      %1279 = vmatpush1.msra.mxu0 0.0
      %1280 = vmatprep.subr.mxu0 0.0
      %1281 = vmatpush1.msra.mxu0 0.0
      %1282 = vmatprep.subr.mxu0 0.0
      %1283 = vmatpush1.msra.mxu0 0.0
      %1284 = vmatprep.subr.mxu0 0.0
      %1285 = vmatpush1.msra.mxu0 0.0
      %1286 = vmatprep.subr.mxu0 0.0
      %1287 = vmatpush1.msra.mxu0 0.0
      %1288 = vmatprep.subr.mxu0 0.0
      %1289 = vmatpush1.msra.mxu0 0.0
      %1290 = vmatprep.subr.mxu0 0.0
      %1291 = vmatpush1.msra.mxu0 0.0
      %1292 = vmatprep.subr.mxu0 0.0
      %1293 = vmatpush1.msra.mxu0 0.0
      %1294 = vmatprep.subr.mxu0 0.0
      %1295 = vmatpush1.msra.mxu0 0.0
      %1296 = vmatprep.subr.mxu0 0.0
      %1297 = vmatpush1.msra.mxu0 0.0
      %1298 = vmatprep.subr.mxu0 0.0
      %1299 = vmatpush1.msra.mxu0 0.0
      %1300 = vmatprep.subr.mxu0 0.0
      %1301 = vmatpush1.msra.mxu0 0.0
      %1302 = vmatprep.subr.mxu0 0.0
      %1303 = vmatpush1.msra.mxu0 0.0
      %1304 = vmatprep.subr.mxu0 0.0
      %1305 = vmatpush1.msra.mxu0 0.0
      %1306 = vmatprep.mubr.f32.mxu0 0.0
      %1307 = vmatmul.mubr.f32.gmra.mrb[0].mxu0 %v1231
      %v1308 = vpop.f32.mrb[0].mxu0
      %v1309 = vadd.f32 0.0, %v1308
      %v1310 = vpop.f32.mrb[0].mxu0
      %1311 = vmatprep.mubr.f32.mxu0 0.0
      %1312 = vmatmul.mubr.f32.gmra.mrb[0].mxu0 %v1234
      %v1313 = vpop.f32.mrb[0].mxu0
      %v1314 = vadd.f32 0.0, %v1313
      %v1315 = vpop.f32.mrb[0].mxu0
      %1316 = vmatprep.mubr.f32.mxu0 0.0
      %1317 = vmatmul.mubr.f32.gmra.mrb[0].mxu0 %v1237
      %v1318 = vpop.f32.mrb[0].mxu0
      %v1319 = vadd.f32 0.0, %v1318
      %v1320 = vpop.f32.mrb[0].mxu0
      %1321 = vmatprep.mubr.f32.mxu0 0.0
      %1322 = vmatmul.mubr.f32.gmra.mrb[0].mxu0 %v1240
      %v1323 = vpop.f32.mrb[0].mxu0
      %v1324 = vadd.f32 0.0, %v1323
      %v1325 = vpop.f32.mrb[0].mxu0
      %1326 = vdwg.mxu0
      %v1327 = vld [vmem:[%s4] sm:$0xff]
      %v1328 = vld [vmem:[%s4 + $0x8] sm:$0xff]
      %v1329 = vld [vmem:[%s4 + $0x10] sm:$0xff]
      %v1330 = vld [vmem:[%s4 + $0x18] sm:$0xff]
      %v1331 = vlaneseq
      %v1332 = vshrl.u32 %v1331, 7
      %v1333 = vsub.s32 0, %v1332
      %v1334 = vrot.slane %v298, %v1333
      %v1336 = vsel %vm550, %v1309, 0
      %v1339 = vsel %vm550, %v1314, 0
      %v1342 = vsel %vm550, %v1319, 0
      %v1345 = vsel %vm550, %v1324, 0
      %1347 = vmatprep.subr.mxu0 0.0
      %1348 = vmatpush1.msra.mxu0 %v1327
      %1349 = vmatprep.subr.mxu0 0.0
      %1350 = vmatpush1.msra.mxu0 %v1328
      %1351 = vmatprep.subr.mxu0 0.0
      %1352 = vmatpush1.msra.mxu0 %v1329
      %1353 = vmatprep.subr.mxu0 0.0
      %1354 = vmatpush1.msra.mxu0 %v1330
      %1355 = vmatprep.subr.mxu0 0.0
      %1356 = vmatpush1.msra.mxu0 0.0
      %1357 = vmatprep.subr.mxu0 0.0
      %1358 = vmatpush1.msra.mxu0 0.0
      %1359 = vmatprep.subr.mxu0 0.0
      %1360 = vmatpush1.msra.mxu0 0.0
      %1361 = vmatprep.subr.mxu0 0.0
      %1362 = vmatpush1.msra.mxu0 0.0
      %1363 = vmatprep.subr.mxu0 0.0
      %1364 = vmatpush1.msra.mxu0 0.0
      %1365 = vmatprep.subr.mxu0 0.0
      %1366 = vmatpush1.msra.mxu0 0.0
      %1367 = vmatprep.subr.mxu0 0.0
      %1368 = vmatpush1.msra.mxu0 0.0
      %1369 = vmatprep.subr.mxu0 0.0
      %1370 = vmatpush1.msra.mxu0 0.0
      %1371 = vmatprep.subr.mxu0 0.0
      %1372 = vmatpush1.msra.mxu0 0.0
      %1373 = vmatprep.subr.mxu0 0.0
      %1374 = vmatpush1.msra.mxu0 0.0
      %1375 = vmatprep.subr.mxu0 0.0
      %1376 = vmatpush1.msra.mxu0 0.0
      %1377 = vmatprep.subr.mxu0 0.0
      %1378 = vmatpush1.msra.mxu0 0.0
      %1379 = vmatprep.subr.mxu0 0.0
      %1380 = vmatpush1.msra.mxu0 0.0
      %1381 = vmatprep.subr.mxu0 0.0
      %1382 = vmatpush1.msra.mxu0 0.0
      %1383 = vmatprep.subr.mxu0 0.0
      %1384 = vmatpush1.msra.mxu0 0.0
      %1385 = vmatprep.subr.mxu0 0.0
      %1386 = vmatpush1.msra.mxu0 0.0
      %1387 = vmatprep.subr.mxu0 0.0
      %1388 = vmatpush1.msra.mxu0 0.0
      %1389 = vmatprep.subr.mxu0 0.0
      %1390 = vmatpush1.msra.mxu0 0.0
      %1391 = vmatprep.subr.mxu0 0.0
      %1392 = vmatpush1.msra.mxu0 0.0
      %1393 = vmatprep.subr.mxu0 0.0
      %1394 = vmatpush1.msra.mxu0 0.0
      %1395 = vmatprep.subr.mxu0 0.0
      %1396 = vmatpush1.msra.mxu0 0.0
      %1397 = vmatprep.subr.mxu0 0.0
      %1398 = vmatpush1.msra.mxu0 0.0
      %1399 = vmatprep.subr.mxu0 0.0
      %1400 = vmatpush1.msra.mxu0 0.0
      %1401 = vmatprep.subr.mxu0 0.0
      %1402 = vmatpush1.msra.mxu0 0.0
      %1403 = vmatprep.subr.mxu0 0.0
      %1404 = vmatpush1.msra.mxu0 0.0
      %1405 = vmatprep.subr.mxu0 0.0
      %1406 = vmatpush1.msra.mxu0 0.0
      %1407 = vmatprep.subr.mxu0 0.0
      %1408 = vmatpush1.msra.mxu0 0.0
      %1409 = vmatprep.subr.mxu0 0.0
      %1410 = vmatpush1.msra.mxu0 0.0
      %1411 = vmatprep.mubr.f32.mxu0 0.0
      %1412 = vmatmul.mubr.f32.gmra.mrb[0].mxu0 %v1336
      %v1413 = vpop.f32.mrb[0].mxu0
      %v1414 = vadd.f32 %v1334, %v1413
      %v1415 = vpop.f32.mrb[0].mxu0
      %1416 = vmatprep.mubr.f32.mxu0 0.0
      %1417 = vmatmul.mubr.f32.gmra.mrb[0].mxu0 %v1339
      %v1418 = vpop.f32.mrb[0].mxu0
      %v1419 = vadd.f32 %v1334, %v1418
      %v1420 = vpop.f32.mrb[0].mxu0
      %1421 = vmatprep.mubr.f32.mxu0 0.0
      %1422 = vmatmul.mubr.f32.gmra.mrb[0].mxu0 %v1342
      %v1423 = vpop.f32.mrb[0].mxu0
      %v1424 = vadd.f32 %v1334, %v1423
      %v1425 = vpop.f32.mrb[0].mxu0
      %1426 = vmatprep.mubr.f32.mxu0 0.0
      %1427 = vmatmul.mubr.f32.gmra.mrb[0].mxu0 %v1345
      %v1428 = vpop.f32.mrb[0].mxu0
      %v1429 = vadd.f32 %v1334, %v1428
      %v1430 = vpop.f32.mrb[0].mxu0
      %1431 = vdwg.mxu0
      %vm1432 = vcmp.ge.f32.partialorder %v1414, 0.0
      %vm1433 = vcmp.ge.f32.partialorder %v1419, 0.0
      %vm1434 = vcmp.ge.f32.partialorder %v1424, 0.0
      %vm1435 = vcmp.ge.f32.partialorder %v1429, 0.0
      %v1436 = vmul.f32 %v1414, 0.01
      %v1437 = vmul.f32 %v1419, 0.01
      %v1438 = vmul.f32 %v1424, 0.01
      %v1439 = vmul.f32 %v1429, 0.01
      %v1440 = vsel %vm1432, %v1414, %v1436
      %v1441 = vsel %vm1433, %v1419, %v1437
      %v1442 = vsel %vm1434, %v1424, %v1438
      %v1443 = vsel %vm1435, %v1429, %v1439
      %v1444 = vld [vmem:[%s5] sm:$0xff]
      %v1445 = vld [vmem:[%s5 + $0x8] sm:$0xff]
      %v1446 = vld [vmem:[%s5 + $0x10] sm:$0xff]
      %v1447 = vld [vmem:[%s5 + $0x18] sm:$0xff]
      %v1448 = vlaneseq
      %v1449 = vshrl.u32 %v1448, 7
      %v1450 = vsub.s32 0, %v1449
      %v1451 = vrot.slane %v299, %v1450
      %v1453 = vsel %vm550, %v1440, 0
      %v1456 = vsel %vm550, %v1441, 0
      %v1459 = vsel %vm550, %v1442, 0
      %v1462 = vsel %vm550, %v1443, 0
      %1464 = vmatprep.subr.mxu0 0.0
      %1465 = vmatpush1.msra.mxu0 %v1444
      %1466 = vmatprep.subr.mxu0 0.0
      %1467 = vmatpush1.msra.mxu0 %v1445
      %1468 = vmatprep.subr.mxu0 0.0
      %1469 = vmatpush1.msra.mxu0 %v1446
      %1470 = vmatprep.subr.mxu0 0.0
      %1471 = vmatpush1.msra.mxu0 %v1447
      %1472 = vmatprep.subr.mxu0 0.0
      %1473 = vmatpush1.msra.mxu0 0.0
      %1474 = vmatprep.subr.mxu0 0.0
      %1475 = vmatpush1.msra.mxu0 0.0
      %1476 = vmatprep.subr.mxu0 0.0
      %1477 = vmatpush1.msra.mxu0 0.0
      %1478 = vmatprep.subr.mxu0 0.0
      %1479 = vmatpush1.msra.mxu0 0.0
      %1480 = vmatprep.subr.mxu0 0.0
      %1481 = vmatpush1.msra.mxu0 0.0
      %1482 = vmatprep.subr.mxu0 0.0
      %1483 = vmatpush1.msra.mxu0 0.0
      %1484 = vmatprep.subr.mxu0 0.0
      %1485 = vmatpush1.msra.mxu0 0.0
      %1486 = vmatprep.subr.mxu0 0.0
      %1487 = vmatpush1.msra.mxu0 0.0
      %1488 = vmatprep.subr.mxu0 0.0
      %1489 = vmatpush1.msra.mxu0 0.0
      %1490 = vmatprep.subr.mxu0 0.0
      %1491 = vmatpush1.msra.mxu0 0.0
      %1492 = vmatprep.subr.mxu0 0.0
      %1493 = vmatpush1.msra.mxu0 0.0
      %1494 = vmatprep.subr.mxu0 0.0
      %1495 = vmatpush1.msra.mxu0 0.0
      %1496 = vmatprep.subr.mxu0 0.0
      %1497 = vmatpush1.msra.mxu0 0.0
      %1498 = vmatprep.subr.mxu0 0.0
      %1499 = vmatpush1.msra.mxu0 0.0
      %1500 = vmatprep.subr.mxu0 0.0
      %1501 = vmatpush1.msra.mxu0 0.0
      %1502 = vmatprep.subr.mxu0 0.0
      %1503 = vmatpush1.msra.mxu0 0.0
      %1504 = vmatprep.subr.mxu0 0.0
      %1505 = vmatpush1.msra.mxu0 0.0
      %1506 = vmatprep.subr.mxu0 0.0
      %1507 = vmatpush1.msra.mxu0 0.0
      %1508 = vmatprep.subr.mxu0 0.0
      %1509 = vmatpush1.msra.mxu0 0.0
      %1510 = vmatprep.subr.mxu0 0.0
      %1511 = vmatpush1.msra.mxu0 0.0
      %1512 = vmatprep.subr.mxu0 0.0
      %1513 = vmatpush1.msra.mxu0 0.0
      %1514 = vmatprep.subr.mxu0 0.0
      %1515 = vmatpush1.msra.mxu0 0.0
      %1516 = vmatprep.subr.mxu0 0.0
      %1517 = vmatpush1.msra.mxu0 0.0
      %1518 = vmatprep.subr.mxu0 0.0
      %1519 = vmatpush1.msra.mxu0 0.0
      %1520 = vmatprep.subr.mxu0 0.0
      %1521 = vmatpush1.msra.mxu0 0.0
      %1522 = vmatprep.subr.mxu0 0.0
      %1523 = vmatpush1.msra.mxu0 0.0
      %1524 = vmatprep.subr.mxu0 0.0
      %1525 = vmatpush1.msra.mxu0 0.0
      %1526 = vmatprep.subr.mxu0 0.0
      %1527 = vmatpush1.msra.mxu0 0.0
      %1528 = vmatprep.mubr.f32.mxu0 0.0
      %1529 = vmatmul.mubr.f32.gmra.mrb[0].mxu0 %v1453
      %v1530 = vpop.f32.mrb[0].mxu0
      %v1531 = vadd.f32 %v1451, %v1530
      %v1532 = vpop.f32.mrb[0].mxu0
      %1533 = vmatprep.mubr.f32.mxu0 0.0
      %1534 = vmatmul.mubr.f32.gmra.mrb[0].mxu0 %v1456
      %v1535 = vpop.f32.mrb[0].mxu0
      %v1536 = vadd.f32 %v1451, %v1535
      %v1537 = vpop.f32.mrb[0].mxu0
      %1538 = vmatprep.mubr.f32.mxu0 0.0
      %1539 = vmatmul.mubr.f32.gmra.mrb[0].mxu0 %v1459
      %v1540 = vpop.f32.mrb[0].mxu0
      %v1541 = vadd.f32 %v1451, %v1540
      %v1542 = vpop.f32.mrb[0].mxu0
      %1543 = vmatprep.mubr.f32.mxu0 0.0
      %1544 = vmatmul.mubr.f32.gmra.mrb[0].mxu0 %v1462
      %v1545 = vpop.f32.mrb[0].mxu0
      %v1546 = vadd.f32 %v1451, %v1545
      %v1547 = vpop.f32.mrb[0].mxu0
      %1548 = vdwg.mxu0
      %v1549 = vsel %vm550, %v1531, -inf
      %v1550 = vsel %vm550, %v1536, -inf
      %v1551 = vsel %vm550, %v1541, -inf
      %v1552 = vsel %vm550, %v1546, -inf
      %v1553 = vmax.f32 %v1549, %v1550
      %v1554 = vmax.f32 %v1551, %v1552
      %v1555 = vmax.f32 %v1553, %v1554
      %v1556 = vrot.slane %v1555, 4
      %v1557 = vmax.f32 %v1555, %v1556
      %v1558 = vrot.slane %v1557, 2
      %v1559 = vmax.f32 %v1557, %v1558
      %v1560 = vrot.slane %v1559, 1
      %v1561 = vmax.f32 %v1559, %v1560
      %v1562 = vsub.f32 %v1531, %v1561
      %v1563 = vsub.f32 %v1536, %v1561
      %v1564 = vsub.f32 %v1541, %v1561
      %v1565 = vsub.f32 %v1546, %v1561
      %v1566 = vmul.f32 %v1562, 1.442695
      %v1567 = vpow.pop %v1566
      %v1568 = vmul.f32 %v1563, 1.442695
      %v1569 = vpow.pop %v1568
      %v1570 = vmul.f32 %v1564, 1.442695
      %v1571 = vpow.pop %v1570
      %v1572 = vmul.f32 %v1565, 1.442695
      %v1573 = vpow.pop %v1572
      %v1575 = vsel %vm550, %v903, 0
      %v1578 = vsel %vm550, %v908, 0
      %v1581 = vsel %vm550, %v913, 0
      %v1584 = vsel %vm550, %v918, 0
      %1586 = vmatprep.subr.mxu0 0.0
      %1587 = vmatpush1.msra.mxu0 %v1567
      %1588 = vmatprep.subr.mxu0 0.0
      %1589 = vmatpush1.msra.mxu0 %v1569
      %1590 = vmatprep.subr.mxu0 0.0
      %1591 = vmatpush1.msra.mxu0 %v1571
      %1592 = vmatprep.subr.mxu0 0.0
      %1593 = vmatpush1.msra.mxu0 %v1573
      %1594 = vmatprep.subr.mxu0 0.0
      %1595 = vmatpush1.msra.mxu0 0.0
      %1596 = vmatprep.subr.mxu0 0.0
      %1597 = vmatpush1.msra.mxu0 0.0
      %1598 = vmatprep.subr.mxu0 0.0
      %1599 = vmatpush1.msra.mxu0 0.0
      %1600 = vmatprep.subr.mxu0 0.0
      %1601 = vmatpush1.msra.mxu0 0.0
      %1602 = vmatprep.subr.mxu0 0.0
      %1603 = vmatpush1.msra.mxu0 0.0
      %1604 = vmatprep.subr.mxu0 0.0
      %1605 = vmatpush1.msra.mxu0 0.0
      %1606 = vmatprep.subr.mxu0 0.0
      %1607 = vmatpush1.msra.mxu0 0.0
      %1608 = vmatprep.subr.mxu0 0.0
      %1609 = vmatpush1.msra.mxu0 0.0
      %1610 = vmatprep.subr.mxu0 0.0
      %1611 = vmatpush1.msra.mxu0 0.0
      %1612 = vmatprep.subr.mxu0 0.0
      %1613 = vmatpush1.msra.mxu0 0.0
      %1614 = vmatprep.subr.mxu0 0.0
      %1615 = vmatpush1.msra.mxu0 0.0
      %1616 = vmatprep.subr.mxu0 0.0
      %1617 = vmatpush1.msra.mxu0 0.0
      %1618 = vmatprep.subr.mxu0 0.0
      %1619 = vmatpush1.msra.mxu0 0.0
      %1620 = vmatprep.subr.mxu0 0.0
      %1621 = vmatpush1.msra.mxu0 0.0
      %1622 = vmatprep.subr.mxu0 0.0
      %1623 = vmatpush1.msra.mxu0 0.0
      %1624 = vmatprep.subr.mxu0 0.0
      %1625 = vmatpush1.msra.mxu0 0.0
      %1626 = vmatprep.subr.mxu0 0.0
      %1627 = vmatpush1.msra.mxu0 0.0
      %1628 = vmatprep.subr.mxu0 0.0
      %1629 = vmatpush1.msra.mxu0 0.0
      %1630 = vmatprep.subr.mxu0 0.0
      %1631 = vmatpush1.msra.mxu0 0.0
      %1632 = vmatprep.subr.mxu0 0.0
      %1633 = vmatpush1.msra.mxu0 0.0
      %1634 = vmatprep.subr.mxu0 0.0
      %1635 = vmatpush1.msra.mxu0 0.0
      %1636 = vmatprep.subr.mxu0 0.0
      %1637 = vmatpush1.msra.mxu0 0.0
      %1638 = vmatprep.subr.mxu0 0.0
      %1639 = vmatpush1.msra.mxu0 0.0
      %1640 = vmatprep.subr.mxu0 0.0
      %1641 = vmatpush1.msra.mxu0 0.0
      %1642 = vmatprep.subr.mxu0 0.0
      %1643 = vmatpush1.msra.mxu0 0.0
      %1644 = vmatprep.subr.mxu0 0.0
      %1645 = vmatpush1.msra.mxu0 0.0
      %1646 = vmatprep.subr.mxu0 0.0
      %1647 = vmatpush1.msra.mxu0 0.0
      %1648 = vmatprep.subr.mxu0 0.0
      %1649 = vmatpush1.msra.mxu0 0.0
      %1650 = vmatprep.mubr.f32.mxu0 0.0
      %1651 = vmatmul.mubr.f32.gmra.mrb[0].mxu0 %v1575
      %v1652 = vpop.f32.mrb[0].mxu0
      %v1653 = vadd.f32 0.0, %v1652
      %v1654 = vpop.f32.mrb[0].mxu0
      %1655 = vmatprep.mubr.f32.mxu0 0.0
      %1656 = vmatmul.mubr.f32.gmra.mrb[0].mxu0 %v1578
      %v1657 = vpop.f32.mrb[0].mxu0
      %v1658 = vadd.f32 0.0, %v1657
      %v1659 = vpop.f32.mrb[0].mxu0
      %1660 = vmatprep.mubr.f32.mxu0 0.0
      %1661 = vmatmul.mubr.f32.gmra.mrb[0].mxu0 %v1581
      %v1662 = vpop.f32.mrb[0].mxu0
      %v1663 = vadd.f32 0.0, %v1662
      %v1664 = vpop.f32.mrb[0].mxu0
      %1665 = vmatprep.mubr.f32.mxu0 0.0
      %1666 = vmatmul.mubr.f32.gmra.mrb[0].mxu0 %v1584
      %v1667 = vpop.f32.mrb[0].mxu0
      %v1668 = vadd.f32 0.0, %v1667
      %v1669 = vpop.f32.mrb[0].mxu0
      %1670 = vdwg.mxu0
      %v1671 = vrcp.pop %v1653
      %v1672 = vrcp.pop %v1658
      %v1673 = vrcp.pop %v1663
      %v1674 = vrcp.pop %v1668
      %v1675 = vmul.f32 %v1567, %v1671
      %v1676 = vmul.f32 %v1569, %v1672
      %v1677 = vmul.f32 %v1571, %v1673
      %v1678 = vmul.f32 %v1573, %v1674
      %1683 = vrot.lane.b32.xlu0 %v1675, 32
      %v1684 = vpop.permute.xlu0 %1683
      %1685 = vrot.lane.b32.xlu0 %v1676, 32
      %v1686 = vpop.permute.xlu0 %1685
      %1687 = vrot.lane.b32.xlu0 %v1677, 32
      %v1688 = vpop.permute.xlu0 %1687
      %1689 = vrot.lane.b32.xlu0 %v1678, 32
      %v1690 = vpop.permute.xlu0 %1689
      %v1695 = vmul.f32 %v1531, %v1684
      %v1696 = vmul.f32 %v1536, %v1686
      %v1697 = vmul.f32 %v1541, %v1688
      %v1698 = vmul.f32 %v1546, %v1690
      %vm1699 = vcmp.ge.f32.partialorder %v1695, 0.0
      %vm1700 = vcmp.ge.f32.partialorder %v1696, 0.0
      %vm1701 = vcmp.ge.f32.partialorder %v1697, 0.0
      %vm1702 = vcmp.ge.f32.partialorder %v1698, 0.0
      %v1703 = vmul.f32 %v1695, 0.01
      %v1704 = vmul.f32 %v1696, 0.01
      %v1705 = vmul.f32 %v1697, 0.01
      %v1706 = vmul.f32 %v1698, 0.01
      %v1707 = vsel %vm1699, %v1695, %v1703
      %v1708 = vsel %vm1700, %v1696, %v1704
      %v1709 = vsel %vm1701, %v1697, %v1705
      %v1710 = vsel %vm1702, %v1698, %v1706
      %1715 = vrot.lane.b32.xlu0 %v1707, 96
      %v1716 = vpop.permute.xlu0 %1715
      %1717 = vrot.lane.b32.xlu0 %v1708, 96
      %v1718 = vpop.permute.xlu0 %1717
      %1719 = vrot.lane.b32.xlu0 %v1709, 96
      %v1720 = vpop.permute.xlu0 %1719
      %1721 = vrot.lane.b32.xlu0 %v1710, 96
      %v1722 = vpop.permute.xlu0 %1721
      %1727 = vst.msk [vmem:[%s295] sm:$0xff] %vm550, %v1716
      %1728 = vst.msk [vmem:[%s295 + $0x8] sm:$0xff] %vm550, %v1718
      %1729 = vst.msk [vmem:[%s295 + $0x10] sm:$0xff] %vm550, %v1720
      %1730 = vst.msk [vmem:[%s295 + $0x18] sm:$0xff] %vm550, %v1722
      %s1731 = smul.u32 4, %s18
      %p1732 = scmp.lt.s32.totalorder %s1731, 7
      %s1733 = scalar_select %p1732, %s1731, 7
      %s1734 = smul.addr %s1733, 8
      %s1735 = scalar_lea.vmem %s7, %s1734
      // Predicated region
      $region49: #{tpu_custom_call.1} parent=47 // pred_check
        %p1736 = pneg %p193
      $region50: #{tpu_custom_call.1} parent=47 // pred_check_branch
        %1738 = sbr.rel (%p1736) target = $region52
      $region51: #{tpu_custom_call.1} parent=47 // pred_region
        %s1739 = smul.u32 4, %s18
      $region52: #{tpu_custom_call.1} parent=47 // pred_fallthru
        _
    $region48: #{tpu_custom_call.1} parent=5 // pred_fallthru
      _
    %p1740 = scmp.le.s32.totalorder 2, %s13
    // Predicated region
    $region53: #{tpu_custom_call.1} parent=5 // pred_check
      %p1741 = pneg %p1740
    $region54: #{tpu_custom_call.1} parent=5 // pred_check_branch
      %1743 = sbr.rel (%p1741) target = $region56
    $region55: #{tpu_custom_call.1} parent=5 // pred_region
      %s1744 = ssub.s32 %s13, 2
      // Predicated region
      $region57: #{tpu_custom_call.1} parent=55 // pred_check
        %p1745 = pneg %p199
      $region58: #{tpu_custom_call.1} parent=55 // pred_check_branch
        %1747 = sbr.rel (%p1745) target = $region60
      $region59: #{tpu_custom_call.1} parent=55 // pred_region
        %s1748 = smul.u32 4, %s19
        %p1749 = scmp.lt.s32.totalorder %s1748, 7
        %s1750 = scalar_select %p1749, %s1748, 7
        %s1751 = smul.addr %s1750, 8
        %s1752 = scalar_lea.vmem %s7, %s1751
      $region60: #{tpu_custom_call.1} parent=55 // pred_fallthru
        _
    $region56: #{tpu_custom_call.1} parent=5 // pred_fallthru
      _
  $region6: #{tpu_custom_call.1} parent=0 // loop_footer
    %s17 = sadd.s32 1, %s13
  $region7: #{tpu_custom_call.1} parent=0 // loop_footer_branch
    %12 = sbr.rel target = $region3
  $region8: #{tpu_custom_call.1} parent=0 // loop_exit
    _

</llo_original>
